<compile_context>
chip_gen: v7x
topology: tpu7x:2x2x1
jax: 0.10.0
libtpu: 0.0.40
codegen_flags: <defaults>
</compile_context>

<pallas_src>
import math
import functools

import jax
import jax.numpy as jnp
from jax.experimental import pallas as pl
from jax.experimental.pallas import tpu as pltpu


def _encoder_layer_kernel(inv_scale, use_bf16, d_k,
                          x_ref, bias_ref,
                          w_qkv_ref, b_qkv_ref,
                          wo_ref, bo_ref, ln_g_ref, ln_b_ref,
                          w1_ref, b1_ref, w2_ref, b2_ref,
                          out_ref, attn_ref):
    mm = (lambda a: a.astype(jnp.bfloat16)) if use_bf16 else (lambda a: a)

    def bdot(lhs, rhs, lhs_contract, rhs_contract):
        # Head-batched matmul (leading batch dim on both operands), f32 acc.
        return jax.lax.dot_general(
            mm(lhs), mm(rhs),
            dimension_numbers=(((lhs_contract,), (rhs_contract,)), ((0,), (0,))),
            preferred_element_type=jnp.float32)

    n_heads = w_qkv_ref.shape[0]
    x = x_ref[0]                                     # (S, d_model) f32
    S, d_model = x.shape

    # Fused Q/K/V projection: one head-batched dot against the packed
    # (H, d_model, 3*d_k) weight -> (H, S, 3*d_k) in head-major layout.
    # TODO(synk): a fully lane-dense (S, d_model) @ (d_model, 3*H*d_k) matmul
    # followed by an in-kernel head-major relayout would avoid replicating x
    # across heads, but needs a 3-D major-dim transpose that Mosaic does not
    # reliably lower; the head-batched form below uses known-good ops only.
    xh = jnp.broadcast_to(mm(x)[None], (n_heads, S, d_model))
    qkv = bdot(xh, w_qkv_ref[...], 2, 1) + b_qkv_ref[...]    # (H, S, 3*d_k)
    q = qkv[:, :, 0 * d_k:1 * d_k]                            # (H, S, d_k)
    k = qkv[:, :, 1 * d_k:2 * d_k]
    v = qkv[:, :, 2 * d_k:3 * d_k]

    # Block-diagonal (per-batch-element) attention scores: (H, S, S) only.
    scores = bdot(q, k, 2, 2) * inv_scale                     # (H, S, S)
    scores = scores + bias_ref[...]                           # (1, S, S) bias

    # Numerically-stable softmax along the key axis.
    s_max = jnp.max(scores, axis=-1, keepdims=True)
    p = jnp.exp(scores - s_max)
    denom = jnp.sum(p, axis=-1, keepdims=True)
    inv = pl.reciprocal(denom, approx=True)                   # EUP reciprocal
    inv = inv * (2.0 - denom * inv)                           # Newton -> f32 exact
    attn = p * inv                                            # (H, S, S)
    attn_ref[0] = attn.astype(attn_ref.dtype)

    ctx = bdot(attn, v, 2, 1)                                 # (H, S, d_k)

    # Output projection: per-head MXU dots + cheap head-sum on the VPU.
    # TODO(synk): a single (S, H*d_k) @ (H*d_k, d_model) matmul would fold the
    # head reduction into the MXU but needs the same major-dim transpose as above.
    o_h = bdot(ctx, wo_ref[...], 2, 1)                        # (H, S, d_model)
    o = jnp.sum(o_h, axis=0) + bo_ref[...]                    # (S, d_model)

    # Residual + LayerNorm.
    y = o + x
    mean = jnp.mean(y, axis=-1, keepdims=True)
    var = jnp.mean((y - mean) ** 2, axis=-1, keepdims=True)
    yn = (y - mean) * jax.lax.rsqrt(var + 1e-5)
    yn = yn * ln_g_ref[...] + ln_b_ref[...]

    # Position-wise FFN: fc2(gelu(fc1(x))), exact erf-GELU (torch default).
    h1 = jnp.dot(mm(yn), mm(w1_ref[...]),
                 preferred_element_type=jnp.float32) + b1_ref[...]
    g = 0.5 * h1 * (1.0 + jax.lax.erf(h1 * (1.0 / math.sqrt(2.0))))
    out = jnp.dot(mm(g), mm(w2_ref[...]),
                  preferred_element_type=jnp.float32) + b2_ref[...]
    out_ref[0] = out.astype(out_ref.dtype)


def encoder_layer(x, attn_mask, params, *, n_heads, d_k,
                  use_bf16_matmul=False, attn_dtype=jnp.float32,
                  vmem_limit_bytes=None):
    """x: (B, S, d_model) f32; attn_mask: (B, S, S) bool (True = masked)."""
    B, S, d_model = x.shape
    (wq, bq, wk, bk, wv, bv, wo, bo, ln_g, ln_b, w1, b1, w2, b2) = params
    d_ff = w1.shape[1]
    hdk = n_heads * d_k

    # Pack head-major fused QKV weight/bias (wrapper-side reshapes, free).
    def head_major(w):   # (d_model, H*d_k) -> (H, d_model, d_k)
        return jnp.transpose(w.reshape(d_model, n_heads, d_k), (1, 0, 2))

    def head_bias(b):    # (1, H*d_k) -> (H, 1, d_k)
        return jnp.transpose(b.reshape(1, n_heads, d_k), (1, 0, 2))

    w_qkv = jnp.concatenate([head_major(wq), head_major(wk), head_major(wv)],
                            axis=-1)                          # (H, d_model, 3*d_k)
    b_qkv = jnp.concatenate([head_bias(bq), head_bias(bk), head_bias(bv)],
                            axis=-1)                          # (H, 1, 3*d_k)
    wo_h = wo.reshape(n_heads, d_k, d_model)                  # (H, d_k, d_model)

    # Optionally stream matmul weights as bf16 (f32 accumulation stays).
    wdt = jnp.bfloat16 if use_bf16_matmul else jnp.float32
    w_qkv_c, wo_c = w_qkv.astype(wdt), wo_h.astype(wdt)
    w1_c, w2_c = w1.astype(wdt), w2.astype(wdt)

    # Additive attention bias, one (S, S) slab per batch element.
    bias = jnp.where(attn_mask, jnp.float32(-1e9), jnp.float32(0.0))  # (B, S, S)

    kernel = functools.partial(_encoder_layer_kernel,
                               1.0 / math.sqrt(float(d_k)), use_bf16_matmul, d_k)

    def full_spec(shape):
        idx = (0,) * len(shape)
        return pl.BlockSpec(shape, lambda b, _i=idx: _i)

    # Advisory cost estimate for XLA scheduling around the fused call.
    flops = int(2 * B * S * d_model * 3 * hdk            # QKV projection
                + 2 * B * n_heads * S * S * d_k * 2      # scores + attn@V
                + 2 * B * S * hdk * d_model              # output projection
                + 2 * B * S * d_model * d_ff * 2)        # FFN
    transcendentals = int(B * n_heads * S * S + B * S * d_ff)
    param_bytes = sum(int(a.size) * a.dtype.itemsize for a in
                      (w_qkv_c, b_qkv, wo_c, bo, ln_g, ln_b, w1_c, b1, w2_c, b2))
    bytes_accessed = int(x.size * 4 + bias.size * 4 + B * S * d_model * 4
                         + B * n_heads * S * S * jnp.dtype(attn_dtype).itemsize
                         + param_bytes)

    compiler_kwargs = dict(dimension_semantics=("parallel",))
    if vmem_limit_bytes is not None:
        compiler_kwargs["vmem_limit_bytes"] = vmem_limit_bytes

    enc_out, attn = pl.pallas_call(
        kernel,
        out_shape=(
            jax.ShapeDtypeStruct((B, S, d_model), jnp.float32),
            jax.ShapeDtypeStruct((B, n_heads, S, S), attn_dtype),
        ),
        grid_spec=pltpu.PrefetchScalarGridSpec(
            num_scalar_prefetch=0,
            grid=(B,),
            in_specs=[
                pl.BlockSpec((1, S, d_model), lambda b: (b, 0, 0)),    # x
                pl.BlockSpec((1, S, S), lambda b: (b, 0, 0)),          # mask bias
                full_spec((n_heads, d_model, 3 * d_k)),                # W_QKV
                full_spec((n_heads, 1, 3 * d_k)),                      # b_QKV
                full_spec((n_heads, d_k, d_model)),                    # W_O
                full_spec((1, d_model)),                               # b_O
                full_spec((1, d_model)), full_spec((1, d_model)),      # LN g, b
                full_spec((d_model, d_ff)), full_spec((1, d_ff)),      # fc1
                full_spec((d_ff, d_model)), full_spec((1, d_model)),   # fc2
            ],
            out_specs=[
                pl.BlockSpec((1, S, d_model), lambda b: (b, 0, 0)),
                pl.BlockSpec((1, n_heads, S, S), lambda b: (b, 0, 0, 0)),
            ],
        ),
        compiler_params=pltpu.CompilerParams(**compiler_kwargs),
        cost_estimate=pl.CostEstimate(flops=flops,
                                      transcendentals=transcendentals,
                                      bytes_accessed=bytes_accessed),
    )(x, bias, w_qkv_c, b_qkv, wo_c, bo, ln_g, ln_b, w1_c, b1, w2_c, b2)

    return enc_out, attn


def _reference(x, mask, params, *, n_heads, d_k):
    """Pure-JAX reference mirroring the PyTorch forward, for a sanity check."""
    (wq, bq, wk, bk, wv, bv, wo, bo, ln_g, ln_b, w1, b1, w2, b2) = params
    B, S, d_model = x.shape
    q = (x @ wq + bq).reshape(B, S, n_heads, d_k).transpose(0, 2, 1, 3)
    k = (x @ wk + bk).reshape(B, S, n_heads, d_k).transpose(0, 2, 1, 3)
    v = (x @ wv + bv).reshape(B, S, n_heads, d_k).transpose(0, 2, 1, 3)
    scores = jnp.einsum('bhqd,bhkd->bhqk', q, k) / math.sqrt(d_k)
    scores = jnp.where(mask[:, None, :, :], -1e9, scores)
    attn = jax.nn.softmax(scores, axis=-1)
    ctx = jnp.einsum('bhqk,bhkd->bhqd', attn, v)
    ctx = ctx.transpose(0, 2, 1, 3).reshape(B, S, n_heads * d_k)
    o = ctx @ wo + bo
    y = o + x
    mean = jnp.mean(y, axis=-1, keepdims=True)
    var = jnp.mean((y - mean) ** 2, axis=-1, keepdims=True)
    yn = (y - mean) / jnp.sqrt(var + 1e-5) * ln_g + ln_b
    h1 = yn @ w1 + b1
    g = 0.5 * h1 * (1.0 + jax.lax.erf(h1 / math.sqrt(2.0)))
    return g @ w2 + b2, attn


if __name__ == "__main__":
    # Small, module-consistent shapes.
    B, S = 2, 8
    n_heads, d_model, d_ff, d_k = 4, 32, 64, 8
    hdk = n_heads * d_k

    key = jax.random.PRNGKey(0)
    keys = jax.random.split(key, 16)

    def init(k, shape, scale=0.1):
        return jax.random.normal(k, shape, dtype=jnp.float32) * scale

    params = (
        init(keys[0], (d_model, hdk)), init(keys[1], (1, hdk)),        # W_Q
        init(keys[2], (d_model, hdk)), init(keys[3], (1, hdk)),        # W_K
        init(keys[4], (d_model, hdk)), init(keys[5], (1, hdk)),        # W_V
        init(keys[6], (hdk, d_model)), init(keys[7], (1, d_model)),    # W_O
        jnp.ones((1, d_model), jnp.float32),                           # LN gamma
        jnp.zeros((1, d_model), jnp.float32),                          # LN beta
        init(keys[8], (d_model, d_ff)), init(keys[9], (1, d_ff)),      # fc1
        init(keys[10], (d_ff, d_model)), init(keys[11], (1, d_model)), # fc2
    )

    x = jax.random.normal(keys[12], (B, S, d_model), dtype=jnp.float32)
    # Key-padding style self-attention mask: True = masked.
    valid_lens = jnp.array([S, S - 3])
    key_ids = jnp.arange(S)
    mask = (key_ids[None, None, :] >= valid_lens[:, None, None])
    mask = jnp.broadcast_to(mask, (B, S, S))

    # f32 operands / f32 attention output for exact parity with the reference.
    # On v6e/v7x pass use_bf16_matmul=True (and optionally attn_dtype=bf16,
    # vmem_limit_bytes=...) for the MXU / HBM-bandwidth wins.
    enc_out, attn = encoder_layer(x, mask, params, n_heads=n_heads, d_k=d_k)
    jax.block_until_ready((enc_out, attn))

    ref_out, ref_attn = _reference(x, mask, params, n_heads=n_heads, d_k=d_k)
    assert jnp.allclose(enc_out, ref_out, atol=1e-4, rtol=1e-4), "enc_out mismatch"
    assert jnp.allclose(attn, ref_attn, atol=1e-4, rtol=1e-4), "attn mismatch"

    print("KERNEL_OK")
</pallas_src>

<mosaic_0001>
module attributes {stable_mosaic.version = 11 : i64} {
  func.func @_encoder_layer_kernel(%arg0: i32, %arg1: memref<1x8x32xf32, #tpu.memory_space<vmem>>, %arg2: memref<1x8x8xf32, #tpu.memory_space<vmem>>, %arg3: memref<4x32x24xf32, #tpu.memory_space<vmem>>, %arg4: memref<4x1x24xf32, #tpu.memory_space<vmem>>, %arg5: memref<4x8x32xf32, #tpu.memory_space<vmem>>, %arg6: memref<1x32xf32, #tpu.memory_space<vmem>>, %arg7: memref<1x32xf32, #tpu.memory_space<vmem>>, %arg8: memref<1x32xf32, #tpu.memory_space<vmem>>, %arg9: memref<32x64xf32, #tpu.memory_space<vmem>>, %arg10: memref<1x64xf32, #tpu.memory_space<vmem>>, %arg11: memref<64x32xf32, #tpu.memory_space<vmem>>, %arg12: memref<1x32xf32, #tpu.memory_space<vmem>>, %arg13: memref<1x8x32xf32, #tpu.memory_space<vmem>>, %arg14: memref<1x4x8x8xf32, #tpu.memory_space<vmem>>) attributes {dimension_semantics = [#tpu.dimension_semantics<parallel>], iteration_bounds = array<i64: 2>, scalar_prefetch = 0 : i64, scratch_operands = 0 : i64, tpu.core_type = #tpu.core_type<tc>, window_params = [{transform_indices = @transform_0, window_bounds = array<i64: 1, 8, 32>}, {transform_indices = @transform_1, window_bounds = array<i64: 1, 8, 8>}, {pipeline_mode = #tpu.pipeline_mode<synchronous>, transform_indices = @transform_2, window_bounds = array<i64: 4, 32, 24>}, {pipeline_mode = #tpu.pipeline_mode<synchronous>, transform_indices = @transform_3, window_bounds = array<i64: 4, 1, 24>}, {pipeline_mode = #tpu.pipeline_mode<synchronous>, transform_indices = @transform_4, window_bounds = array<i64: 4, 8, 32>}, {pipeline_mode = #tpu.pipeline_mode<synchronous>, transform_indices = @transform_5, window_bounds = array<i64: 1, 32>}, {pipeline_mode = #tpu.pipeline_mode<synchronous>, transform_indices = @transform_6, window_bounds = array<i64: 1, 32>}, {pipeline_mode = #tpu.pipeline_mode<synchronous>, transform_indices = @transform_7, window_bounds = array<i64: 1, 32>}, {pipeline_mode = #tpu.pipeline_mode<synchronous>, transform_indices = @transform_8, window_bounds = array<i64: 32, 64>}, {pipeline_mode = #tpu.pipeline_mode<synchronous>, transform_indices = @transform_9, window_bounds = array<i64: 1, 64>}, {pipeline_mode = #tpu.pipeline_mode<synchronous>, transform_indices = @transform_10, window_bounds = array<i64: 64, 32>}, {pipeline_mode = #tpu.pipeline_mode<synchronous>, transform_indices = @transform_11, window_bounds = array<i64: 1, 32>}, {transform_indices = @transform_12, window_bounds = array<i64: 1, 8, 32>}, {transform_indices = @transform_13, window_bounds = array<i64: 1, 4, 8, 8>}]} {
    %c0 = arith.constant 0 : index
    %c0_0 = arith.constant 0 : index
    %c0_1 = arith.constant 0 : index
    %0 = vector.load %arg1[%c0, %c0_0, %c0_1] : memref<1x8x32xf32, #tpu.memory_space<vmem>>, vector<1x8x32xf32>
    %1 = vector.shape_cast %0 : vector<1x8x32xf32> to vector<8x32xf32>
    %2 = vector.shape_cast %1 : vector<8x32xf32> to vector<1x8x32xf32>
    %3 = vector.shape_cast %2 : vector<1x8x32xf32> to vector<1x8x32xf32>
    %4 = vector.broadcast %3 : vector<1x8x32xf32> to vector<4x8x32xf32>
    %c0_2 = arith.constant 0 : index
    %c0_3 = arith.constant 0 : index
    %c0_4 = arith.constant 0 : index
    %5 = vector.load %arg3[%c0_2, %c0_3, %c0_4] : memref<4x32x24xf32, #tpu.memory_space<vmem>>, vector<4x32x24xf32>
    %cst = arith.constant dense<0.000000e+00> : vector<4x8x24xf32>
    %6 = tpu.matmul %4, %5, %cst {dimension_numbers = #tpu.dot_dimension_numbers<[2], [1], [1], [2], [0, 0, 0, 1, 1, 2], [0], [0]>} : vector<4x8x32xf32>, vector<4x32x24xf32>, vector<4x8x24xf32> -> vector<4x8x24xf32>
    %c0_5 = arith.constant 0 : index
    %c0_6 = arith.constant 0 : index
    %c0_7 = arith.constant 0 : index
    %7 = vector.load %arg4[%c0_5, %c0_6, %c0_7] : memref<4x1x24xf32, #tpu.memory_space<vmem>>, vector<4x1x24xf32>
    %8 = vector.broadcast %7 : vector<4x1x24xf32> to vector<4x8x24xf32>
    %9 = arith.addf %6, %8 : vector<4x8x24xf32>
    %10 = vector.extract_strided_slice %9 {offsets = [0, 0, 0], sizes = [4, 8, 8], strides = [1, 1, 1]} : vector<4x8x24xf32> to vector<4x8x8xf32>
    %11 = vector.extract_strided_slice %9 {offsets = [0, 0, 8], sizes = [4, 8, 8], strides = [1, 1, 1]} : vector<4x8x24xf32> to vector<4x8x8xf32>
    %12 = vector.extract_strided_slice %9 {offsets = [0, 0, 16], sizes = [4, 8, 8], strides = [1, 1, 1]} : vector<4x8x24xf32> to vector<4x8x8xf32>
    %cst_8 = arith.constant dense<0.000000e+00> : vector<4x8x8xf32>
    %13 = tpu.matmul %10, %11, %cst_8 {dimension_numbers = #tpu.dot_dimension_numbers<[2], [2], [1], [1], [0, 0, 0, 1, 1, 1], [0], [0]>} : vector<4x8x8xf32>, vector<4x8x8xf32>, vector<4x8x8xf32> -> vector<4x8x8xf32>
    %cst_9 = arith.constant 0.353553385 : f32
    %14 = vector.broadcast %cst_9 : f32 to vector<4x8x8xf32>
    %15 = arith.mulf %13, %14 : vector<4x8x8xf32>
    %c0_10 = arith.constant 0 : index
    %c0_11 = arith.constant 0 : index
    %c0_12 = arith.constant 0 : index
    %16 = vector.load %arg2[%c0_10, %c0_11, %c0_12] : memref<1x8x8xf32, #tpu.memory_space<vmem>>, vector<1x8x8xf32>
    %17 = vector.broadcast %16 : vector<1x8x8xf32> to vector<4x8x8xf32>
    %18 = arith.addf %15, %17 : vector<4x8x8xf32>
    %cst_13 = arith.constant dense<0xFF800000> : vector<4x8xf32>
    %19 = vector.multi_reduction <maximumf>, %18, %cst_13 [2] : vector<4x8x8xf32> to vector<4x8xf32>
    %20 = vector.shape_cast %19 : vector<4x8xf32> to vector<4x8x1xf32>
    %21 = vector.broadcast %20 : vector<4x8x1xf32> to vector<4x8x8xf32>
    %22 = arith.subf %18, %21 : vector<4x8x8xf32>
    %23 = math.exp %22 : vector<4x8x8xf32>
    %cst_14 = arith.constant dense<0.000000e+00> : vector<4x8xf32>
    %24 = vector.multi_reduction <add>, %23, %cst_14 [2] : vector<4x8x8xf32> to vector<4x8xf32>
    %25 = vector.shape_cast %24 : vector<4x8xf32> to vector<4x8x1xf32>
    %26 = tpu.reciprocal %25 {approx = true} : vector<4x8x1xf32> -> vector<4x8x1xf32>
    %27 = arith.mulf %25, %26 : vector<4x8x1xf32>
    %cst_15 = arith.constant 2.000000e+00 : f32
    %28 = vector.broadcast %cst_15 : f32 to vector<4x8x1xf32>
    %29 = arith.subf %28, %27 : vector<4x8x1xf32>
    %30 = arith.mulf %26, %29 : vector<4x8x1xf32>
    %31 = vector.broadcast %30 : vector<4x8x1xf32> to vector<4x8x8xf32>
    %32 = arith.mulf %23, %31 : vector<4x8x8xf32>
    %c0_16 = arith.constant 0 : index
    %c0_17 = arith.constant 0 : index
    %c0_18 = arith.constant 0 : index
    %c0_19 = arith.constant 0 : index
    %33 = vector.load %arg14[%c0_16, %c0_17, %c0_18, %c0_19] : memref<1x4x8x8xf32, #tpu.memory_space<vmem>>, vector<1x4x8x8xf32>
    %34 = vector.shape_cast %33 : vector<1x4x8x8xf32> to vector<4x8x8xf32>
    %35 = vector.shape_cast %32 : vector<4x8x8xf32> to vector<1x4x8x8xf32>
    tpu.vector_store %arg14[%c0_16, %c0_17, %c0_18, %c0_19], %35 {strides = array<i32>} : memref<1x4x8x8xf32, #tpu.memory_space<vmem>>, vector<1x4x8x8xf32>,
    %cst_20 = arith.constant dense<0.000000e+00> : vector<4x8x8xf32>
    %36 = tpu.matmul %32, %12, %cst_20 {dimension_numbers = #tpu.dot_dimension_numbers<[2], [1], [1], [2], [0, 0, 0, 1, 1, 2], [0], [0]>} : vector<4x8x8xf32>, vector<4x8x8xf32>, vector<4x8x8xf32> -> vector<4x8x8xf32>
    %c0_21 = arith.constant 0 : index
    %c0_22 = arith.constant 0 : index
    %c0_23 = arith.constant 0 : index
    %37 = vector.load %arg5[%c0_21, %c0_22, %c0_23] : memref<4x8x32xf32, #tpu.memory_space<vmem>>, vector<4x8x32xf32>
    %cst_24 = arith.constant dense<0.000000e+00> : vector<4x8x32xf32>
    %38 = tpu.matmul %36, %37, %cst_24 {dimension_numbers = #tpu.dot_dimension_numbers<[2], [1], [1], [2], [0, 0, 0, 1, 1, 2], [0], [0]>} : vector<4x8x8xf32>, vector<4x8x32xf32>, vector<4x8x32xf32> -> vector<4x8x32xf32>
    %cst_25 = arith.constant dense<0.000000e+00> : vector<8x32xf32>
    %39 = vector.multi_reduction <add>, %38, %cst_25 [0] : vector<4x8x32xf32> to vector<8x32xf32>
    %c0_26 = arith.constant 0 : index
    %c0_27 = arith.constant 0 : index
    %40 = vector.load %arg6[%c0_26, %c0_27] : memref<1x32xf32, #tpu.memory_space<vmem>>, vector<1x32xf32>
    %41 = vector.broadcast %40 : vector<1x32xf32> to vector<8x32xf32>
    %42 = arith.addf %39, %41 : vector<8x32xf32>
    %43 = arith.addf %42, %1 : vector<8x32xf32>
    %cst_28 = arith.constant dense<0.000000e+00> : vector<8xf32>
    %44 = vector.multi_reduction <add>, %43, %cst_28 [1] : vector<8x32xf32> to vector<8xf32>
    %45 = vector.shape_cast %44 : vector<8xf32> to vector<8x1xf32>
    %cst_29 = arith.constant 3.200000e+01 : f32
    %46 = vector.broadcast %cst_29 : f32 to vector<8x1xf32>
    %47 = arith.divf %45, %46 : vector<8x1xf32>
    %48 = vector.broadcast %47 : vector<8x1xf32> to vector<8x32xf32>
    %49 = arith.subf %43, %48 : vector<8x32xf32>
    %50 = arith.mulf %49, %49 : vector<8x32xf32>
    %cst_30 = arith.constant dense<0.000000e+00> : vector<8xf32>
    %51 = vector.multi_reduction <add>, %50, %cst_30 [1] : vector<8x32xf32> to vector<8xf32>
    %52 = vector.shape_cast %51 : vector<8xf32> to vector<8x1xf32>
    %cst_31 = arith.constant 3.200000e+01 : f32
    %53 = vector.broadcast %cst_31 : f32 to vector<8x1xf32>
    %54 = arith.divf %52, %53 : vector<8x1xf32>
    %55 = vector.broadcast %47 : vector<8x1xf32> to vector<8x32xf32>
    %56 = arith.subf %43, %55 : vector<8x32xf32>
    %cst_32 = arith.constant 9.99999974E-6 : f32
    %57 = vector.broadcast %cst_32 : f32 to vector<8x1xf32>
    %58 = arith.addf %54, %57 : vector<8x1xf32>
    %59 = math.rsqrt %58 : vector<8x1xf32>
    %60 = vector.broadcast %59 : vector<8x1xf32> to vector<8x32xf32>
    %61 = arith.mulf %56, %60 : vector<8x32xf32>
    %c0_33 = arith.constant 0 : index
    %c0_34 = arith.constant 0 : index
    %62 = vector.load %arg7[%c0_33, %c0_34] : memref<1x32xf32, #tpu.memory_space<vmem>>, vector<1x32xf32>
    %63 = vector.broadcast %62 : vector<1x32xf32> to vector<8x32xf32>
    %64 = arith.mulf %61, %63 : vector<8x32xf32>
    %c0_35 = arith.constant 0 : index
    %c0_36 = arith.constant 0 : index
    %65 = vector.load %arg8[%c0_35, %c0_36] : memref<1x32xf32, #tpu.memory_space<vmem>>, vector<1x32xf32>
    %66 = vector.broadcast %65 : vector<1x32xf32> to vector<8x32xf32>
    %67 = arith.addf %64, %66 : vector<8x32xf32>
    %c0_37 = arith.constant 0 : index
    %c0_38 = arith.constant 0 : index
    %68 = vector.load %arg9[%c0_37, %c0_38] : memref<32x64xf32, #tpu.memory_space<vmem>>, vector<32x64xf32>
    %cst_39 = arith.constant dense<0.000000e+00> : vector<8x64xf32>
    %69 = tpu.matmul %67, %68, %cst_39 {dimension_numbers = #tpu.dot_dimension_numbers<[1], [0], [0], [1], [0, 0, 1, 1], [], []>} : vector<8x32xf32>, vector<32x64xf32>, vector<8x64xf32> -> vector<8x64xf32>
    %c0_40 = arith.constant 0 : index
    %c0_41 = arith.constant 0 : index
    %70 = vector.load %arg10[%c0_40, %c0_41] : memref<1x64xf32, #tpu.memory_space<vmem>>, vector<1x64xf32>
    %71 = vector.broadcast %70 : vector<1x64xf32> to vector<8x64xf32>
    %72 = arith.addf %69, %71 : vector<8x64xf32>
    %cst_42 = arith.constant 5.000000e-01 : f32
    %73 = vector.broadcast %cst_42 : f32 to vector<8x64xf32>
    %74 = arith.mulf %73, %72 : vector<8x64xf32>
    %cst_43 = arith.constant 0.707106769 : f32
    %75 = vector.broadcast %cst_43 : f32 to vector<8x64xf32>
    %76 = arith.mulf %72, %75 : vector<8x64xf32>
    %77 = math.erf %76 : vector<8x64xf32>
    %cst_44 = arith.constant 1.000000e+00 : f32
    %78 = vector.broadcast %cst_44 : f32 to vector<8x64xf32>
    %79 = arith.addf %78, %77 : vector<8x64xf32>
    %80 = arith.mulf %74, %79 : vector<8x64xf32>
    %c0_45 = arith.constant 0 : index
    %c0_46 = arith.constant 0 : index
    %81 = vector.load %arg11[%c0_45, %c0_46] : memref<64x32xf32, #tpu.memory_space<vmem>>, vector<64x32xf32>
    %cst_47 = arith.constant dense<0.000000e+00> : vector<8x32xf32>
    %82 = tpu.matmul %80, %81, %cst_47 {dimension_numbers = #tpu.dot_dimension_numbers<[1], [0], [0], [1], [0, 0, 1, 1], [], []>} : vector<8x64xf32>, vector<64x32xf32>, vector<8x32xf32> -> vector<8x32xf32>
    %c0_48 = arith.constant 0 : index
    %c0_49 = arith.constant 0 : index
    %83 = vector.load %arg12[%c0_48, %c0_49] : memref<1x32xf32, #tpu.memory_space<vmem>>, vector<1x32xf32>
    %84 = vector.broadcast %83 : vector<1x32xf32> to vector<8x32xf32>
    %85 = arith.addf %82, %84 : vector<8x32xf32>
    %c0_50 = arith.constant 0 : index
    %c0_51 = arith.constant 0 : index
    %c0_52 = arith.constant 0 : index
    %86 = vector.load %arg13[%c0_50, %c0_51, %c0_52] : memref<1x8x32xf32, #tpu.memory_space<vmem>>, vector<1x8x32xf32>
    %87 = vector.shape_cast %86 : vector<1x8x32xf32> to vector<8x32xf32>
    %88 = vector.shape_cast %85 : vector<8x32xf32> to vector<1x8x32xf32>
    tpu.vector_store %arg13[%c0_50, %c0_51, %c0_52], %88 {strides = array<i32>} : memref<1x8x32xf32, #tpu.memory_space<vmem>>, vector<1x8x32xf32>,
    return
  }
  func.func @transform_0(%arg0: i32) -> (i32, i32, i32) {
    %c0_i32 = arith.constant 0 : i32
    %c0_i32_0 = arith.constant 0 : i32
    %c0_i32_1 = arith.constant 0 : i32
    return %arg0, %c0_i32, %c0_i32_0 : i32, i32, i32
  }
  func.func @transform_1(%arg0: i32) -> (i32, i32, i32) {
    %c0_i32 = arith.constant 0 : i32
    %c0_i32_0 = arith.constant 0 : i32
    %c0_i32_1 = arith.constant 0 : i32
    return %arg0, %c0_i32, %c0_i32_0 : i32, i32, i32
  }
  func.func @transform_2(%arg0: i32) -> (i32, i32, i32) {
    %c0_i32 = arith.constant 0 : i32
    %c0_i32_0 = arith.constant 0 : i32
    %c0_i32_1 = arith.constant 0 : i32
    %c0_i32_2 = arith.constant 0 : i32
    return %c0_i32, %c0_i32_0, %c0_i32_1 : i32, i32, i32
  }
  func.func @transform_3(%arg0: i32) -> (i32, i32, i32) {
    %c0_i32 = arith.constant 0 : i32
    %c0_i32_0 = arith.constant 0 : i32
    %c0_i32_1 = arith.constant 0 : i32
    %c0_i32_2 = arith.constant 0 : i32
    return %c0_i32, %c0_i32_0, %c0_i32_1 : i32, i32, i32
  }
  func.func @transform_4(%arg0: i32) -> (i32, i32, i32) {
    %c0_i32 = arith.constant 0 : i32
    %c0_i32_0 = arith.constant 0 : i32
    %c0_i32_1 = arith.constant 0 : i32
    %c0_i32_2 = arith.constant 0 : i32
    return %c0_i32, %c0_i32_0, %c0_i32_1 : i32, i32, i32
  }
  func.func @transform_5(%arg0: i32) -> (i32, i32) {
    %c0_i32 = arith.constant 0 : i32
    %c0_i32_0 = arith.constant 0 : i32
    %c0_i32_1 = arith.constant 0 : i32
    return %c0_i32, %c0_i32_0 : i32, i32
  }
  func.func @transform_6(%arg0: i32) -> (i32, i32) {
    %c0_i32 = arith.constant 0 : i32
    %c0_i32_0 = arith.constant 0 : i32
    %c0_i32_1 = arith.constant 0 : i32
    return %c0_i32, %c0_i32_0 : i32, i32
  }
  func.func @transform_7(%arg0: i32) -> (i32, i32) {
    %c0_i32 = arith.constant 0 : i32
    %c0_i32_0 = arith.constant 0 : i32
    %c0_i32_1 = arith.constant 0 : i32
    return %c0_i32, %c0_i32_0 : i32, i32
  }
  func.func @transform_8(%arg0: i32) -> (i32, i32) {
    %c0_i32 = arith.constant 0 : i32
    %c0_i32_0 = arith.constant 0 : i32
    %c0_i32_1 = arith.constant 0 : i32
    return %c0_i32, %c0_i32_0 : i32, i32
  }
  func.func @transform_9(%arg0: i32) -> (i32, i32) {
    %c0_i32 = arith.constant 0 : i32
    %c0_i32_0 = arith.constant 0 : i32
    %c0_i32_1 = arith.constant 0 : i32
    return %c0_i32, %c0_i32_0 : i32, i32
  }
  func.func @transform_10(%arg0: i32) -> (i32, i32) {
    %c0_i32 = arith.constant 0 : i32
    %c0_i32_0 = arith.constant 0 : i32
    %c0_i32_1 = arith.constant 0 : i32
    return %c0_i32, %c0_i32_0 : i32, i32
  }
  func.func @transform_11(%arg0: i32) -> (i32, i32) {
    %c0_i32 = arith.constant 0 : i32
    %c0_i32_0 = arith.constant 0 : i32
    %c0_i32_1 = arith.constant 0 : i32
    return %c0_i32, %c0_i32_0 : i32, i32
  }
  func.func @transform_12(%arg0: i32) -> (i32, i32, i32) {
    %c0_i32 = arith.constant 0 : i32
    %c0_i32_0 = arith.constant 0 : i32
    %c0_i32_1 = arith.constant 0 : i32
    return %arg0, %c0_i32, %c0_i32_0 : i32, i32, i32
  }
  func.func @transform_13(%arg0: i32) -> (i32, i32, i32, i32) {
    %c0_i32 = arith.constant 0 : i32
    %c0_i32_0 = arith.constant 0 : i32
    %c0_i32_1 = arith.constant 0 : i32
    %c0_i32_2 = arith.constant 0 : i32
    return %arg0, %c0_i32, %c0_i32_0, %c0_i32_1 : i32, i32, i32, i32
  }
}

</mosaic_0001>

<llo_original>
// kernel: tpu_custom_call.1
$region0: #{tpu_custom_call.1}
  #allocation0 [shape = 'u32[]', space=smem, size = 0x4, offset = 0x4, fixed_abs, tag = 'smem constant byte address 0x4 - core index']
  #allocation1 [shape = 'u32[144,128]{1,0:T(1,128)}', space=vmem, size = 0x12000, scoped, tag = 'internal scratch']
  %s0 = inlined_call_operand.vmem [shape: f32[2,8,32], index: 0, kind: input, shape index: {}]
  %s1 = inlined_call_operand.vmem [shape: f32[2,8,8], index: 1, kind: input, shape index: {}]
  %s2 = inlined_call_operand.vmem [shape: f32[4,32,24], index: 2, kind: input, shape index: {}]
  %s3 = inlined_call_operand.vmem [shape: f32[4,1,24], index: 3, kind: input, shape index: {}]
  %s4 = inlined_call_operand.vmem [shape: f32[4,8,32], index: 4, kind: input, shape index: {}]
  %s5 = inlined_call_operand.vmem [shape: f32[1,32], index: 5, kind: input, shape index: {}]
  %s6 = inlined_call_operand.vmem [shape: f32[1,32], index: 6, kind: input, shape index: {}]
  %s7 = inlined_call_operand.vmem [shape: f32[1,32], index: 7, kind: input, shape index: {}]
  %s8 = inlined_call_operand.vmem [shape: f32[32,64], index: 8, kind: input, shape index: {}]
  %s9 = inlined_call_operand.vmem [shape: f32[1,64], index: 9, kind: input, shape index: {}]
  %s10 = inlined_call_operand.vmem [shape: f32[64,32], index: 10, kind: input, shape index: {}]
  %s11 = inlined_call_operand.vmem [shape: f32[1,32], index: 11, kind: input, shape index: {}]
  %s12 = inlined_call_operand.hbm [shape: f32[2,8,32], index: 12, kind: output, shape index: {0}]
  %s13 = inlined_call_operand.hbm [shape: f32[2,4,8,8], index: 13, kind: output, shape index: {1}]
  %14 = xla_tuple %s12, %s13
  %s15 = sld [smem:[#allocation0]]
  $region89: #{tpu_custom_call.1} parent=0
    _
  %s17 = ssub.s32 1, %s15
  %s18 = scalar_select 0, %s17, %s15
  $region1: #{tpu_custom_call.1} parent=0
    #allocation2 [shape = 'u8[8192]{0}', space=vmem, size = 0x2000, scoped, tag = 'output window, operand 0']
    #allocation3 [shape = 's32[2]{0}', space=sflag, size = 0x8, scoped, tag = 'scoped memory for tpu_custom_call.1']
    #allocation4 [shape = 'u8[32768]{0}', space=vmem, size = 0x8000, scoped, tag = 'output window, operand 1']
    #allocation5 [shape = 's32[2]{0}', space=sflag, size = 0x8, scoped, tag = 'scoped memory for tpu_custom_call.1']
    %19 = vsyncpa [#allocation3], 0
    %s20 = scalar_lea.sflag [#allocation3], 1
    %21 = vsyncpa %s20, 0
    %22 = vsyncpa [#allocation5], 0
    %s23 = scalar_lea.sflag [#allocation5], 1
    %24 = vsyncpa %s23, 0
    loop: start=0, step=1, limit=4
    $region2: #{tpu_custom_call.1} parent=1 // loop_pre_header
      _
    $region3: #{tpu_custom_call.1} parent=1 // loop_header
      %s26 = sphi 0, %s30
      %p27 = scmp.ge.s32.totalorder %s26, 4
      %s36 = sphi 0, %s38
      %s39 = sphi 0, %s36
      %s40 = sphi 0, %s39
      %s56 = sphi 0, %s40
      %s62 = sphi 0, %s64
      %s65 = sphi 0, %s62
      %s66 = sphi 0, %s65
      %s82 = sphi 0, %s66
      %s86 = sphi 0, %s86
      %s88 = sphi 0, %s86
      %s89 = sphi 0, %s88
      %s103 = sphi 0, %s89
      %s107 = sphi 0, %s107
      %s109 = sphi 0, %s107
      %s110 = sphi 0, %s109
      %s124 = sphi 0, %s110
      %s128 = sphi 0, %s128
      %s130 = sphi 0, %s128
      %s131 = sphi 0, %s130
      %s145 = sphi 0, %s131
      %s149 = sphi 0, %s149
      %s151 = sphi 0, %s149
      %s152 = sphi 0, %s151
      %s166 = sphi 0, %s152
      %s170 = sphi 0, %s170
      %s172 = sphi 0, %s170
      %s173 = sphi 0, %s172
      %s187 = sphi 0, %s173
      %s191 = sphi 0, %s191
      %s193 = sphi 0, %s191
      %s194 = sphi 0, %s193
      %s208 = sphi 0, %s194
      %s212 = sphi 0, %s212
      %s214 = sphi 0, %s212
      %s215 = sphi 0, %s214
      %s229 = sphi 0, %s215
      %s233 = sphi 0, %s233
      %s235 = sphi 0, %s233
      %s236 = sphi 0, %s235
      %s250 = sphi 0, %s236
      %s254 = sphi 0, %s254
      %s256 = sphi 0, %s254
      %s257 = sphi 0, %s256
      %s271 = sphi 0, %s257
      %s275 = sphi 0, %s275
      %s277 = sphi 0, %s275
      %s278 = sphi 0, %s277
      %s292 = sphi 0, %s278
      %s298 = sphi 0, %s300
      %s301 = sphi 0, %s298
      %s302 = sphi 0, %s301
      %s318 = sphi 0, %s302
      %s324 = sphi 0, %s326
      %s327 = sphi 0, %s324
      %s328 = sphi 0, %s327
      %s344 = sphi 0, %s328
    $region4: #{tpu_custom_call.1} parent=1 // loop_header_branch
      %29 = sbr.rel (%p27) target = $region8
    $region5: #{tpu_custom_call.1} parent=1 // loop_body
      %s31 = ssub.s32 %s26, 1
      %s32 = ssub.s32 %s26, 2
      %s33 = sadd.s32 %s26, 1
      %s34 = ssub.s32 %s26, %s33
      %p35 = scmp.eq.s32.totalorder %s34, 0
      %s37 = sadd.s32 %s36, 1
      %s38 = scalar_select %p35, %s36, %s37
      %p41 = pneg %p35
      %p42 = scmp.eq.s32.totalorder %s26, 1
      %p43 = por %p41, %p42
      %p44 = scmp.ne.s32.totalorder %s36, %s39
      %p45 = scmp.eq.s32.totalorder %s26, 0
      %p46 = por %p44, %p45
      %p47 = scmp.ne.s32.totalorder %s36, %s39
      %p48 = scmp.eq.s32.totalorder %s31, 1
      %p49 = por %p47, %p48
      %p50 = scmp.ne.s32.totalorder %s39, %s40
      %p51 = scmp.eq.s32.totalorder %s31, 0
      %p52 = por %p50, %p51
      %p53 = scmp.ne.s32.totalorder %s39, %s40
      %p54 = scmp.eq.s32.totalorder %s32, 1
      %p55 = por %p53, %p54
      %p57 = scmp.ne.s32.totalorder %s40, %s56
      %p58 = scmp.eq.s32.totalorder %s32, 0
      %p59 = por %p57, %p58
      %s60 = ssub.s32 %s26, %s33
      %p61 = scmp.eq.s32.totalorder %s60, 0
      %s63 = sadd.s32 %s62, 1
      %s64 = scalar_select %p61, %s62, %s63
      %p67 = pneg %p61
      %p68 = scmp.eq.s32.totalorder %s26, 1
      %p69 = por %p67, %p68
      %p70 = scmp.ne.s32.totalorder %s62, %s65
      %p71 = scmp.eq.s32.totalorder %s26, 0
      %p72 = por %p70, %p71
      %p73 = scmp.ne.s32.totalorder %s62, %s65
      %p74 = scmp.eq.s32.totalorder %s31, 1
      %p75 = por %p73, %p74
      %p76 = scmp.ne.s32.totalorder %s65, %s66
      %p77 = scmp.eq.s32.totalorder %s31, 0
      %p78 = por %p76, %p77
      %p79 = scmp.ne.s32.totalorder %s65, %s66
      %p80 = scmp.eq.s32.totalorder %s32, 1
      %p81 = por %p79, %p80
      %p83 = scmp.ne.s32.totalorder %s66, %s82
      %p84 = scmp.eq.s32.totalorder %s32, 0
      %p85 = por %p83, %p84
      %s87 = sadd.s32 %s86, 1
      %p90 = scmp.eq.s32.totalorder %s26, 1
      %p91 = scmp.ne.s32.totalorder %s86, %s88
      %p92 = scmp.eq.s32.totalorder %s26, 0
      %p93 = por %p91, %p92
      %p94 = scmp.ne.s32.totalorder %s86, %s88
      %p95 = scmp.eq.s32.totalorder %s31, 1
      %p96 = por %p94, %p95
      %p97 = scmp.ne.s32.totalorder %s88, %s89
      %p98 = scmp.eq.s32.totalorder %s31, 0
      %p99 = por %p97, %p98
      %p100 = scmp.ne.s32.totalorder %s88, %s89
      %p101 = scmp.eq.s32.totalorder %s32, 1
      %p102 = por %p100, %p101
      %p104 = scmp.ne.s32.totalorder %s89, %s103
      %p105 = scmp.eq.s32.totalorder %s32, 0
      %p106 = por %p104, %p105
      %s108 = sadd.s32 %s107, 1
      %p111 = scmp.eq.s32.totalorder %s26, 1
      %p112 = scmp.ne.s32.totalorder %s107, %s109
      %p113 = scmp.eq.s32.totalorder %s26, 0
      %p114 = por %p112, %p113
      %p115 = scmp.ne.s32.totalorder %s107, %s109
      %p116 = scmp.eq.s32.totalorder %s31, 1
      %p117 = por %p115, %p116
      %p118 = scmp.ne.s32.totalorder %s109, %s110
      %p119 = scmp.eq.s32.totalorder %s31, 0
      %p120 = por %p118, %p119
      %p121 = scmp.ne.s32.totalorder %s109, %s110
      %p122 = scmp.eq.s32.totalorder %s32, 1
      %p123 = por %p121, %p122
      %p125 = scmp.ne.s32.totalorder %s110, %s124
      %p126 = scmp.eq.s32.totalorder %s32, 0
      %p127 = por %p125, %p126
      %s129 = sadd.s32 %s128, 1
      %p132 = scmp.eq.s32.totalorder %s26, 1
      %p133 = scmp.ne.s32.totalorder %s128, %s130
      %p134 = scmp.eq.s32.totalorder %s26, 0
      %p135 = por %p133, %p134
      %p136 = scmp.ne.s32.totalorder %s128, %s130
      %p137 = scmp.eq.s32.totalorder %s31, 1
      %p138 = por %p136, %p137
      %p139 = scmp.ne.s32.totalorder %s130, %s131
      %p140 = scmp.eq.s32.totalorder %s31, 0
      %p141 = por %p139, %p140
      %p142 = scmp.ne.s32.totalorder %s130, %s131
      %p143 = scmp.eq.s32.totalorder %s32, 1
      %p144 = por %p142, %p143
      %p146 = scmp.ne.s32.totalorder %s131, %s145
      %p147 = scmp.eq.s32.totalorder %s32, 0
      %p148 = por %p146, %p147
      %s150 = sadd.s32 %s149, 1
      %p153 = scmp.eq.s32.totalorder %s26, 1
      %p154 = scmp.ne.s32.totalorder %s149, %s151
      %p155 = scmp.eq.s32.totalorder %s26, 0
      %p156 = por %p154, %p155
      %p157 = scmp.ne.s32.totalorder %s149, %s151
      %p158 = scmp.eq.s32.totalorder %s31, 1
      %p159 = por %p157, %p158
      %p160 = scmp.ne.s32.totalorder %s151, %s152
      %p161 = scmp.eq.s32.totalorder %s31, 0
      %p162 = por %p160, %p161
      %p163 = scmp.ne.s32.totalorder %s151, %s152
      %p164 = scmp.eq.s32.totalorder %s32, 1
      %p165 = por %p163, %p164
      %p167 = scmp.ne.s32.totalorder %s152, %s166
      %p168 = scmp.eq.s32.totalorder %s32, 0
      %p169 = por %p167, %p168
      %s171 = sadd.s32 %s170, 1
      %p174 = scmp.eq.s32.totalorder %s26, 1
      %p175 = scmp.ne.s32.totalorder %s170, %s172
      %p176 = scmp.eq.s32.totalorder %s26, 0
      %p177 = por %p175, %p176
      %p178 = scmp.ne.s32.totalorder %s170, %s172
      %p179 = scmp.eq.s32.totalorder %s31, 1
      %p180 = por %p178, %p179
      %p181 = scmp.ne.s32.totalorder %s172, %s173
      %p182 = scmp.eq.s32.totalorder %s31, 0
      %p183 = por %p181, %p182
      %p184 = scmp.ne.s32.totalorder %s172, %s173
      %p185 = scmp.eq.s32.totalorder %s32, 1
      %p186 = por %p184, %p185
      %p188 = scmp.ne.s32.totalorder %s173, %s187
      %p189 = scmp.eq.s32.totalorder %s32, 0
      %p190 = por %p188, %p189
      %s192 = sadd.s32 %s191, 1
      %p195 = scmp.eq.s32.totalorder %s26, 1
      %p196 = scmp.ne.s32.totalorder %s191, %s193
      %p197 = scmp.eq.s32.totalorder %s26, 0
      %p198 = por %p196, %p197
      %p199 = scmp.ne.s32.totalorder %s191, %s193
      %p200 = scmp.eq.s32.totalorder %s31, 1
      %p201 = por %p199, %p200
      %p202 = scmp.ne.s32.totalorder %s193, %s194
      %p203 = scmp.eq.s32.totalorder %s31, 0
      %p204 = por %p202, %p203
      %p205 = scmp.ne.s32.totalorder %s193, %s194
      %p206 = scmp.eq.s32.totalorder %s32, 1
      %p207 = por %p205, %p206
      %p209 = scmp.ne.s32.totalorder %s194, %s208
      %p210 = scmp.eq.s32.totalorder %s32, 0
      %p211 = por %p209, %p210
      %s213 = sadd.s32 %s212, 1
      %p216 = scmp.eq.s32.totalorder %s26, 1
      %p217 = scmp.ne.s32.totalorder %s212, %s214
      %p218 = scmp.eq.s32.totalorder %s26, 0
      %p219 = por %p217, %p218
      %p220 = scmp.ne.s32.totalorder %s212, %s214
      %p221 = scmp.eq.s32.totalorder %s31, 1
      %p222 = por %p220, %p221
      %p223 = scmp.ne.s32.totalorder %s214, %s215
      %p224 = scmp.eq.s32.totalorder %s31, 0
      %p225 = por %p223, %p224
      %p226 = scmp.ne.s32.totalorder %s214, %s215
      %p227 = scmp.eq.s32.totalorder %s32, 1
      %p228 = por %p226, %p227
      %p230 = scmp.ne.s32.totalorder %s215, %s229
      %p231 = scmp.eq.s32.totalorder %s32, 0
      %p232 = por %p230, %p231
      %s234 = sadd.s32 %s233, 1
      %p237 = scmp.eq.s32.totalorder %s26, 1
      %p238 = scmp.ne.s32.totalorder %s233, %s235
      %p239 = scmp.eq.s32.totalorder %s26, 0
      %p240 = por %p238, %p239
      %p241 = scmp.ne.s32.totalorder %s233, %s235
      %p242 = scmp.eq.s32.totalorder %s31, 1
      %p243 = por %p241, %p242
      %p244 = scmp.ne.s32.totalorder %s235, %s236
      %p245 = scmp.eq.s32.totalorder %s31, 0
      %p246 = por %p244, %p245
      %p247 = scmp.ne.s32.totalorder %s235, %s236
      %p248 = scmp.eq.s32.totalorder %s32, 1
      %p249 = por %p247, %p248
      %p251 = scmp.ne.s32.totalorder %s236, %s250
      %p252 = scmp.eq.s32.totalorder %s32, 0
      %p253 = por %p251, %p252
      %s255 = sadd.s32 %s254, 1
      %p258 = scmp.eq.s32.totalorder %s26, 1
      %p259 = scmp.ne.s32.totalorder %s254, %s256
      %p260 = scmp.eq.s32.totalorder %s26, 0
      %p261 = por %p259, %p260
      %p262 = scmp.ne.s32.totalorder %s254, %s256
      %p263 = scmp.eq.s32.totalorder %s31, 1
      %p264 = por %p262, %p263
      %p265 = scmp.ne.s32.totalorder %s256, %s257
      %p266 = scmp.eq.s32.totalorder %s31, 0
      %p267 = por %p265, %p266
      %p268 = scmp.ne.s32.totalorder %s256, %s257
      %p269 = scmp.eq.s32.totalorder %s32, 1
      %p270 = por %p268, %p269
      %p272 = scmp.ne.s32.totalorder %s257, %s271
      %p273 = scmp.eq.s32.totalorder %s32, 0
      %p274 = por %p272, %p273
      %s276 = sadd.s32 %s275, 1
      %p279 = scmp.eq.s32.totalorder %s26, 1
      %p280 = scmp.ne.s32.totalorder %s275, %s277
      %p281 = scmp.eq.s32.totalorder %s26, 0
      %p282 = por %p280, %p281
      %p283 = scmp.ne.s32.totalorder %s275, %s277
      %p284 = scmp.eq.s32.totalorder %s31, 1
      %p285 = por %p283, %p284
      %p286 = scmp.ne.s32.totalorder %s277, %s278
      %p287 = scmp.eq.s32.totalorder %s31, 0
      %p288 = por %p286, %p287
      %p289 = scmp.ne.s32.totalorder %s277, %s278
      %p290 = scmp.eq.s32.totalorder %s32, 1
      %p291 = por %p289, %p290
      %p293 = scmp.ne.s32.totalorder %s278, %s292
      %p294 = scmp.eq.s32.totalorder %s32, 0
      %p295 = por %p293, %p294
      %s296 = ssub.s32 %s26, %s33
      %p297 = scmp.eq.s32.totalorder %s296, 0
      %s299 = sadd.s32 %s298, 1
      %s300 = scalar_select %p297, %s298, %s299
      %p303 = pneg %p297
      %p304 = scmp.eq.s32.totalorder %s26, 1
      %p305 = por %p303, %p304
      %p306 = scmp.ne.s32.totalorder %s298, %s301
      %p307 = scmp.eq.s32.totalorder %s26, 0
      %p308 = por %p306, %p307
      %p309 = scmp.ne.s32.totalorder %s298, %s301
      %p310 = scmp.eq.s32.totalorder %s31, 1
      %p311 = por %p309, %p310
      %p312 = scmp.ne.s32.totalorder %s301, %s302
      %p313 = scmp.eq.s32.totalorder %s31, 0
      %p314 = por %p312, %p313
      %p315 = scmp.ne.s32.totalorder %s301, %s302
      %p316 = scmp.eq.s32.totalorder %s32, 1
      %p317 = por %p315, %p316
      %p319 = scmp.ne.s32.totalorder %s302, %s318
      %p320 = scmp.eq.s32.totalorder %s32, 0
      %p321 = por %p319, %p320
      %s322 = ssub.s32 %s26, %s33
      %p323 = scmp.eq.s32.totalorder %s322, 0
      %s325 = sadd.s32 %s324, 1
      %s326 = scalar_select %p323, %s324, %s325
      %p329 = pneg %p323
      %p330 = scmp.eq.s32.totalorder %s26, 1
      %p331 = por %p329, %p330
      %p332 = scmp.ne.s32.totalorder %s324, %s327
      %p333 = scmp.eq.s32.totalorder %s26, 0
      %p334 = por %p332, %p333
      %p335 = scmp.ne.s32.totalorder %s324, %s327
      %p336 = scmp.eq.s32.totalorder %s31, 1
      %p337 = por %p335, %p336
      %p338 = scmp.ne.s32.totalorder %s327, %s328
      %p339 = scmp.eq.s32.totalorder %s31, 0
      %p340 = por %p338, %p339
      %p341 = scmp.ne.s32.totalorder %s327, %s328
      %p342 = scmp.eq.s32.totalorder %s32, 1
      %p343 = por %p341, %p342
      %p345 = scmp.ne.s32.totalorder %s328, %s344
      %p346 = scmp.eq.s32.totalorder %s32, 0
      %p347 = por %p345, %p346
      %p348 = scmp.le.s32.totalorder 1, %s26
      %p349 = scmp.lt.s32.totalorder %s26, 3
      %p350 = pnand %p348, %p349
      %p351 = pneg %p350
      // Predicated region
      $region9: #{tpu_custom_call.1} parent=5 // pred_check
        _
      $region10: #{tpu_custom_call.1} parent=5 // pred_check_branch
        %353 = sbr.rel (%p350) target = $region12
      $region11: #{tpu_custom_call.1} parent=5 // pred_region
        %s354 = ssub.s32 %s26, 1
        // Predicated region
        $region13: #{tpu_custom_call.1} parent=11 // pred_check
          %p355 = pneg %p99
        $region14: #{tpu_custom_call.1} parent=11 // pred_check_branch
          %357 = sbr.rel (%p355) target = $region16
        $region15: #{tpu_custom_call.1} parent=11 // pred_region
          _
        $region16: #{tpu_custom_call.1} parent=11 // pred_fallthru
          _
        // Predicated region
        $region17: #{tpu_custom_call.1} parent=11 // pred_check
          %p358 = pneg %p120
        $region18: #{tpu_custom_call.1} parent=11 // pred_check_branch
          %360 = sbr.rel (%p358) target = $region20
        $region19: #{tpu_custom_call.1} parent=11 // pred_region
          _
        $region20: #{tpu_custom_call.1} parent=11 // pred_fallthru
          _
        // Predicated region
        $region21: #{tpu_custom_call.1} parent=11 // pred_check
          %p361 = pneg %p141
        $region22: #{tpu_custom_call.1} parent=11 // pred_check_branch
          %363 = sbr.rel (%p361) target = $region24
        $region23: #{tpu_custom_call.1} parent=11 // pred_region
          _
        $region24: #{tpu_custom_call.1} parent=11 // pred_fallthru
          _
        // Predicated region
        $region25: #{tpu_custom_call.1} parent=11 // pred_check
          %p364 = pneg %p162
        $region26: #{tpu_custom_call.1} parent=11 // pred_check_branch
          %366 = sbr.rel (%p364) target = $region28
        $region27: #{tpu_custom_call.1} parent=11 // pred_region
          _
        $region28: #{tpu_custom_call.1} parent=11 // pred_fallthru
          _
        // Predicated region
        $region29: #{tpu_custom_call.1} parent=11 // pred_check
          %p367 = pneg %p183
        $region30: #{tpu_custom_call.1} parent=11 // pred_check_branch
          %369 = sbr.rel (%p367) target = $region32
        $region31: #{tpu_custom_call.1} parent=11 // pred_region
          _
        $region32: #{tpu_custom_call.1} parent=11 // pred_fallthru
          _
        // Predicated region
        $region33: #{tpu_custom_call.1} parent=11 // pred_check
          %p370 = pneg %p204
        $region34: #{tpu_custom_call.1} parent=11 // pred_check_branch
          %372 = sbr.rel (%p370) target = $region36
        $region35: #{tpu_custom_call.1} parent=11 // pred_region
          _
        $region36: #{tpu_custom_call.1} parent=11 // pred_fallthru
          _
        // Predicated region
        $region37: #{tpu_custom_call.1} parent=11 // pred_check
          %p373 = pneg %p225
        $region38: #{tpu_custom_call.1} parent=11 // pred_check_branch
          %375 = sbr.rel (%p373) target = $region40
        $region39: #{tpu_custom_call.1} parent=11 // pred_region
          _
        $region40: #{tpu_custom_call.1} parent=11 // pred_fallthru
          _
        // Predicated region
        $region41: #{tpu_custom_call.1} parent=11 // pred_check
          %p376 = pneg %p246
        $region42: #{tpu_custom_call.1} parent=11 // pred_check_branch
          %378 = sbr.rel (%p376) target = $region44
        $region43: #{tpu_custom_call.1} parent=11 // pred_region
          _
        $region44: #{tpu_custom_call.1} parent=11 // pred_fallthru
          _
        // Predicated region
        $region45: #{tpu_custom_call.1} parent=11 // pred_check
          %p379 = pneg %p267
        $region46: #{tpu_custom_call.1} parent=11 // pred_check_branch
          %381 = sbr.rel (%p379) target = $region48
        $region47: #{tpu_custom_call.1} parent=11 // pred_region
          _
        $region48: #{tpu_custom_call.1} parent=11 // pred_fallthru
          _
        // Predicated region
        $region49: #{tpu_custom_call.1} parent=11 // pred_check
          %p382 = pneg %p288
        $region50: #{tpu_custom_call.1} parent=11 // pred_check_branch
          %384 = sbr.rel (%p382) target = $region52
        $region51: #{tpu_custom_call.1} parent=11 // pred_region
          _
        $region52: #{tpu_custom_call.1} parent=11 // pred_fallthru
          _
      $region12: #{tpu_custom_call.1} parent=5 // pred_fallthru
        _
      %p385 = scmp.lt.s32.totalorder %s26, 2
      // Predicated region
      $region53: #{tpu_custom_call.1} parent=5 // pred_check
        %p386 = pneg %p385
      $region54: #{tpu_custom_call.1} parent=5 // pred_check_branch
        %388 = sbr.rel (%p386) target = $region56
      $region55: #{tpu_custom_call.1} parent=5 // pred_region
        // Predicated region
        $region57: #{tpu_custom_call.1} parent=55 // pred_check
          %p389 = pneg %p46
        $region58: #{tpu_custom_call.1} parent=55 // pred_check_branch
          %391 = sbr.rel (%p389) target = $region60
        $region59: #{tpu_custom_call.1} parent=55 // pred_region
          %p392 = scmp.lt.s32.totalorder %s26, 1
          %s393 = scalar_select %p392, %s26, 1
          %s394 = smul.addr %s393, 8
          %s395 = scalar_lea.vmem %s0, %s394
        $region60: #{tpu_custom_call.1} parent=55 // pred_fallthru
          _
        // Predicated region
        $region61: #{tpu_custom_call.1} parent=55 // pred_check
          %p396 = pneg %p72
        $region62: #{tpu_custom_call.1} parent=55 // pred_check_branch
          %398 = sbr.rel (%p396) target = $region64
        $region63: #{tpu_custom_call.1} parent=55 // pred_region
          %p399 = scmp.lt.s32.totalorder %s26, 1
          %s400 = scalar_select %p399, %s26, 1
          %s401 = smul.addr %s400, 8
          %s402 = scalar_lea.vmem %s1, %s401
        $region64: #{tpu_custom_call.1} parent=55 // pred_fallthru
          _
      $region56: #{tpu_custom_call.1} parent=5 // pred_fallthru
        _
      %p403 = scmp.le.s32.totalorder 1, %s26
      %p404 = scmp.lt.s32.totalorder %s26, 3
      %p405 = pnand %p403, %p404
      %p406 = pneg %p405
      // Predicated region
      $region65: #{tpu_custom_call.1} parent=5 // pred_check
        _
      $region66: #{tpu_custom_call.1} parent=5 // pred_check_branch
        %408 = sbr.rel (%p405) target = $region68
      $region67: #{tpu_custom_call.1} parent=5 // pred_region
        %s409 = ssub.s32 %s26, 1
        %p410 = scmp.lt.s32.totalorder %s31, 1
        %s411 = scalar_select %p410, %s31, 1
        %s412 = smul.addr %s411, 8
        %s413 = scalar_lea.vmem %s0, %s412
        %p414 = pneg %p52
        %p415 = pneg %p49
        %p416 = scmp.lt.s32.totalorder %s31, 1
        %s417 = scalar_select %p416, %s31, 1
        %s418 = smul.addr %s417, 8
        %s419 = scalar_lea.vmem %s1, %s418
        %p420 = pneg %p78
        %p421 = pneg %p75
        %p422 = pneg %p99
        %p423 = pneg %p96
        %p424 = pneg %p120
        %p425 = pneg %p117
        %p426 = pneg %p141
        %p427 = pneg %p138
        %p428 = pneg %p162
        %p429 = pneg %p159
        %p430 = pneg %p183
        %p431 = pneg %p180
        %p432 = pneg %p204
        %p433 = pneg %p201
        %p434 = pneg %p225
        %p435 = pneg %p222
        %p436 = pneg %p246
        %p437 = pneg %p243
        %p438 = pneg %p267
        %p439 = pneg %p264
        %p440 = pneg %p288
        %p441 = pneg %p285
        %p442 = pneg %p314
        %p443 = pneg %p311
        %s444 = sand.u32 %s301, 1
        %s445 = scalar_lea.sflag [#allocation3], %s444
        %s446 = sand.u32 %s301, 1
        %s447 = smul.addr %s446, 8
        %s448 = scalar_lea.vmem [#allocation2], %s447
        %p449 = pneg %p340
        %p450 = pneg %p337
        %s451 = sand.u32 %s327, 1
        %s452 = scalar_lea.sflag [#allocation5], %s451
        %s453 = sand.u32 %s327, 1
        %s454 = smul.addr %s453, 32
        %s455 = scalar_lea.vmem [#allocation4], %s454
        %p456 = scmp.lt.s32.totalorder %s31, 1
        %s457 = scalar_select %p456, %s31, 1
        %s458 = smul.addr %s457, 8
        %s459 = scalar_lea.vmem %s0, %s458
        %p460 = scmp.lt.s32.totalorder %s31, 1
        %s461 = scalar_select %p460, %s31, 1
        %s462 = smul.addr %s461, 8
        %s463 = scalar_lea.vmem %s1, %s462
        %v464 = vld [vmem:[%s459] sm:$0xff]
        %v465 = vld [vmem:[%s2] sm:$0xff]
        %v466 = vld [vmem:[%s2 + $0x8] sm:$0xff]
        %v467 = vld [vmem:[%s2 + $0x10] sm:$0xff]
        %v468 = vld [vmem:[%s2 + $0x18] sm:$0xff]
        %v469 = vld [vmem:[%s2 + $0x20] sm:$0xff]
        %v470 = vld [vmem:[%s2 + $0x28] sm:$0xff]
        %v471 = vld [vmem:[%s2 + $0x30] sm:$0xff]
        %v472 = vld [vmem:[%s2 + $0x38] sm:$0xff]
        %v473 = vld [vmem:[%s2 + $0x40] sm:$0xff]
        %v474 = vld [vmem:[%s2 + $0x48] sm:$0xff]
        %v475 = vld [vmem:[%s2 + $0x50] sm:$0xff]
        %v476 = vld [vmem:[%s2 + $0x58] sm:$0xff]
        %v477 = vld [vmem:[%s2 + $0x60] sm:$0xff]
        %v478 = vld [vmem:[%s2 + $0x68] sm:$0xff]
        %v479 = vld [vmem:[%s2 + $0x70] sm:$0xff]
        %v480 = vld [vmem:[%s2 + $0x78] sm:$0xff]
        %v481 = vld [vmem:[%s3] sm:$0x1]
        %v482 = vld [vmem:[%s3 + $0x1] sm:$0x1]
        %v483 = vld [vmem:[%s3 + $0x2] sm:$0x1]
        %v484 = vld [vmem:[%s3 + $0x3] sm:$0x1]
        %v489 = vlaneseq
        %v490 = vshrl.u32 %v489, 7
        %v491 = vsub.s32 0, %v490
        %v492 = vrot.slane %v481, %v491
        %v493 = vlaneseq
        %v494 = vshrl.u32 %v493, 7
        %v495 = vsub.s32 0, %v494
        %v496 = vrot.slane %v482, %v495
        %v497 = vlaneseq
        %v498 = vshrl.u32 %v497, 7
        %v499 = vsub.s32 0, %v498
        %v500 = vrot.slane %v483, %v499
        %v501 = vlaneseq
        %v502 = vshrl.u32 %v501, 7
        %v503 = vsub.s32 0, %v502
        %v504 = vrot.slane %v484, %v503
        %vm509 = vcmask 261120
        %v511 = vsel %vm509, %v464, 0
        %513 = vmatprep.subr.mxu0 0.0
        %514 = vmatpush1.msra.mxu0 %v465
        %515 = vmatprep.subr.mxu0 0.0
        %516 = vmatpush1.msra.mxu0 %v466
        %517 = vmatprep.subr.mxu0 0.0
        %518 = vmatpush1.msra.mxu0 %v467
        %519 = vmatprep.subr.mxu0 0.0
        %520 = vmatpush1.msra.mxu0 %v468
        %521 = vmatprep.subr.mxu0 0.0
        %522 = vmatpush1.msra.mxu0 0.0
        %523 = vmatprep.subr.mxu0 0.0
        %524 = vmatpush1.msra.mxu0 0.0
        %525 = vmatprep.subr.mxu0 0.0
        %526 = vmatpush1.msra.mxu0 0.0
        %527 = vmatprep.subr.mxu0 0.0
        %528 = vmatpush1.msra.mxu0 0.0
        %529 = vmatprep.subr.mxu0 0.0
        %530 = vmatpush1.msra.mxu0 0.0
        %531 = vmatprep.subr.mxu0 0.0
        %532 = vmatpush1.msra.mxu0 0.0
        %533 = vmatprep.subr.mxu0 0.0
        %534 = vmatpush1.msra.mxu0 0.0
        %535 = vmatprep.subr.mxu0 0.0
        %536 = vmatpush1.msra.mxu0 0.0
        %537 = vmatprep.subr.mxu0 0.0
        %538 = vmatpush1.msra.mxu0 0.0
        %539 = vmatprep.subr.mxu0 0.0
        %540 = vmatpush1.msra.mxu0 0.0
        %541 = vmatprep.subr.mxu0 0.0
        %542 = vmatpush1.msra.mxu0 0.0
        %543 = vmatprep.subr.mxu0 0.0
        %544 = vmatpush1.msra.mxu0 0.0
        %545 = vmatprep.subr.mxu0 0.0
        %546 = vmatpush1.msra.mxu0 0.0
        %547 = vmatprep.subr.mxu0 0.0
        %548 = vmatpush1.msra.mxu0 0.0
        %549 = vmatprep.subr.mxu0 0.0
        %550 = vmatpush1.msra.mxu0 0.0
        %551 = vmatprep.subr.mxu0 0.0
        %552 = vmatpush1.msra.mxu0 0.0
        %553 = vmatprep.subr.mxu0 0.0
        %554 = vmatpush1.msra.mxu0 0.0
        %555 = vmatprep.subr.mxu0 0.0
        %556 = vmatpush1.msra.mxu0 0.0
        %557 = vmatprep.subr.mxu0 0.0
        %558 = vmatpush1.msra.mxu0 0.0
        %559 = vmatprep.subr.mxu0 0.0
        %560 = vmatpush1.msra.mxu0 0.0
        %561 = vmatprep.subr.mxu0 0.0
        %562 = vmatpush1.msra.mxu0 0.0
        %563 = vmatprep.subr.mxu0 0.0
        %564 = vmatpush1.msra.mxu0 0.0
        %565 = vmatprep.subr.mxu0 0.0
        %566 = vmatpush1.msra.mxu0 0.0
        %567 = vmatprep.subr.mxu0 0.0
        %568 = vmatpush1.msra.mxu0 0.0
        %569 = vmatprep.subr.mxu0 0.0
        %570 = vmatpush1.msra.mxu0 0.0
        %571 = vmatprep.subr.mxu0 0.0
        %572 = vmatpush1.msra.mxu0 0.0
        %573 = vmatprep.subr.mxu0 0.0
        %574 = vmatpush1.msra.mxu0 0.0
        %575 = vmatprep.subr.mxu0 0.0
        %576 = vmatpush1.msra.mxu0 0.0
        %577 = vmatprep.mubr.f32.mxu0 0.0
        %578 = vmatmul.mubr.f32.gmra.mrb[0].mxu0 %v511
        %v579 = vpop.f32.mrb[0].mxu0
        %v580 = vadd.f32 %v492, %v579
        %v581 = vpop.f32.mrb[0].mxu0
        %582 = vdwg.mxu0
        %583 = vmatprep.subr.mxu0 0.0
        %584 = vmatpush1.msra.mxu0 %v469
        %585 = vmatprep.subr.mxu0 0.0
        %586 = vmatpush1.msra.mxu0 %v470
        %587 = vmatprep.subr.mxu0 0.0
        %588 = vmatpush1.msra.mxu0 %v471
        %589 = vmatprep.subr.mxu0 0.0
        %590 = vmatpush1.msra.mxu0 %v472
        %591 = vmatprep.subr.mxu0 0.0
        %592 = vmatpush1.msra.mxu0 0.0
        %593 = vmatprep.subr.mxu0 0.0
        %594 = vmatpush1.msra.mxu0 0.0
        %595 = vmatprep.subr.mxu0 0.0
        %596 = vmatpush1.msra.mxu0 0.0
        %597 = vmatprep.subr.mxu0 0.0
        %598 = vmatpush1.msra.mxu0 0.0
        %599 = vmatprep.subr.mxu0 0.0
        %600 = vmatpush1.msra.mxu0 0.0
        %601 = vmatprep.subr.mxu0 0.0
        %602 = vmatpush1.msra.mxu0 0.0
        %603 = vmatprep.subr.mxu0 0.0
        %604 = vmatpush1.msra.mxu0 0.0
        %605 = vmatprep.subr.mxu0 0.0
        %606 = vmatpush1.msra.mxu0 0.0
        %607 = vmatprep.subr.mxu0 0.0
        %608 = vmatpush1.msra.mxu0 0.0
        %609 = vmatprep.subr.mxu0 0.0
        %610 = vmatpush1.msra.mxu0 0.0
        %611 = vmatprep.subr.mxu0 0.0
        %612 = vmatpush1.msra.mxu0 0.0
        %613 = vmatprep.subr.mxu0 0.0
        %614 = vmatpush1.msra.mxu0 0.0
        %615 = vmatprep.subr.mxu0 0.0
        %616 = vmatpush1.msra.mxu0 0.0
        %617 = vmatprep.subr.mxu0 0.0
        %618 = vmatpush1.msra.mxu0 0.0
        %619 = vmatprep.subr.mxu0 0.0
        %620 = vmatpush1.msra.mxu0 0.0
        %621 = vmatprep.subr.mxu0 0.0
        %622 = vmatpush1.msra.mxu0 0.0
        %623 = vmatprep.subr.mxu0 0.0
        %624 = vmatpush1.msra.mxu0 0.0
        %625 = vmatprep.subr.mxu0 0.0
        %626 = vmatpush1.msra.mxu0 0.0
        %627 = vmatprep.subr.mxu0 0.0
        %628 = vmatpush1.msra.mxu0 0.0
        %629 = vmatprep.subr.mxu0 0.0
        %630 = vmatpush1.msra.mxu0 0.0
        %631 = vmatprep.subr.mxu0 0.0
        %632 = vmatpush1.msra.mxu0 0.0
        %633 = vmatprep.subr.mxu0 0.0
        %634 = vmatpush1.msra.mxu0 0.0
        %635 = vmatprep.subr.mxu0 0.0
        %636 = vmatpush1.msra.mxu0 0.0
        %637 = vmatprep.subr.mxu0 0.0
        %638 = vmatpush1.msra.mxu0 0.0
        %639 = vmatprep.subr.mxu0 0.0
        %640 = vmatpush1.msra.mxu0 0.0
        %641 = vmatprep.subr.mxu0 0.0
        %642 = vmatpush1.msra.mxu0 0.0
        %643 = vmatprep.subr.mxu0 0.0
        %644 = vmatpush1.msra.mxu0 0.0
        %645 = vmatprep.subr.mxu0 0.0
        %646 = vmatpush1.msra.mxu0 0.0
        %647 = vmatprep.mubr.f32.mxu0 0.0
        %648 = vmatmul.mubr.f32.gmra.mrb[0].mxu0 %v511
        %v649 = vpop.f32.mrb[0].mxu0
        %v650 = vadd.f32 %v496, %v649
        %v651 = vpop.f32.mrb[0].mxu0
        %652 = vdwg.mxu0
        %653 = vmatprep.subr.mxu0 0.0
        %654 = vmatpush1.msra.mxu0 %v473
        %655 = vmatprep.subr.mxu0 0.0
        %656 = vmatpush1.msra.mxu0 %v474
        %657 = vmatprep.subr.mxu0 0.0
        %658 = vmatpush1.msra.mxu0 %v475
        %659 = vmatprep.subr.mxu0 0.0
        %660 = vmatpush1.msra.mxu0 %v476
        %661 = vmatprep.subr.mxu0 0.0
        %662 = vmatpush1.msra.mxu0 0.0
        %663 = vmatprep.subr.mxu0 0.0
        %664 = vmatpush1.msra.mxu0 0.0
        %665 = vmatprep.subr.mxu0 0.0
        %666 = vmatpush1.msra.mxu0 0.0
        %667 = vmatprep.subr.mxu0 0.0
        %668 = vmatpush1.msra.mxu0 0.0
        %669 = vmatprep.subr.mxu0 0.0
        %670 = vmatpush1.msra.mxu0 0.0
        %671 = vmatprep.subr.mxu0 0.0
        %672 = vmatpush1.msra.mxu0 0.0
        %673 = vmatprep.subr.mxu0 0.0
        %674 = vmatpush1.msra.mxu0 0.0
        %675 = vmatprep.subr.mxu0 0.0
        %676 = vmatpush1.msra.mxu0 0.0
        %677 = vmatprep.subr.mxu0 0.0
        %678 = vmatpush1.msra.mxu0 0.0
        %679 = vmatprep.subr.mxu0 0.0
        %680 = vmatpush1.msra.mxu0 0.0
        %681 = vmatprep.subr.mxu0 0.0
        %682 = vmatpush1.msra.mxu0 0.0
        %683 = vmatprep.subr.mxu0 0.0
        %684 = vmatpush1.msra.mxu0 0.0
        %685 = vmatprep.subr.mxu0 0.0
        %686 = vmatpush1.msra.mxu0 0.0
        %687 = vmatprep.subr.mxu0 0.0
        %688 = vmatpush1.msra.mxu0 0.0
        %689 = vmatprep.subr.mxu0 0.0
        %690 = vmatpush1.msra.mxu0 0.0
        %691 = vmatprep.subr.mxu0 0.0
        %692 = vmatpush1.msra.mxu0 0.0
        %693 = vmatprep.subr.mxu0 0.0
        %694 = vmatpush1.msra.mxu0 0.0
        %695 = vmatprep.subr.mxu0 0.0
        %696 = vmatpush1.msra.mxu0 0.0
        %697 = vmatprep.subr.mxu0 0.0
        %698 = vmatpush1.msra.mxu0 0.0
        %699 = vmatprep.subr.mxu0 0.0
        %700 = vmatpush1.msra.mxu0 0.0
        %701 = vmatprep.subr.mxu0 0.0
        %702 = vmatpush1.msra.mxu0 0.0
        %703 = vmatprep.subr.mxu0 0.0
        %704 = vmatpush1.msra.mxu0 0.0
        %705 = vmatprep.subr.mxu0 0.0
        %706 = vmatpush1.msra.mxu0 0.0
        %707 = vmatprep.subr.mxu0 0.0
        %708 = vmatpush1.msra.mxu0 0.0
        %709 = vmatprep.subr.mxu0 0.0
        %710 = vmatpush1.msra.mxu0 0.0
        %711 = vmatprep.subr.mxu0 0.0
        %712 = vmatpush1.msra.mxu0 0.0
        %713 = vmatprep.subr.mxu0 0.0
        %714 = vmatpush1.msra.mxu0 0.0
        %715 = vmatprep.subr.mxu0 0.0
        %716 = vmatpush1.msra.mxu0 0.0
        %717 = vmatprep.mubr.f32.mxu0 0.0
        %718 = vmatmul.mubr.f32.gmra.mrb[0].mxu0 %v511
        %v719 = vpop.f32.mrb[0].mxu0
        %v720 = vadd.f32 %v500, %v719
        %v721 = vpop.f32.mrb[0].mxu0
        %722 = vdwg.mxu0
        %723 = vmatprep.subr.mxu0 0.0
        %724 = vmatpush1.msra.mxu0 %v477
        %725 = vmatprep.subr.mxu0 0.0
        %726 = vmatpush1.msra.mxu0 %v478
        %727 = vmatprep.subr.mxu0 0.0
        %728 = vmatpush1.msra.mxu0 %v479
        %729 = vmatprep.subr.mxu0 0.0
        %730 = vmatpush1.msra.mxu0 %v480
        %731 = vmatprep.subr.mxu0 0.0
        %732 = vmatpush1.msra.mxu0 0.0
        %733 = vmatprep.subr.mxu0 0.0
        %734 = vmatpush1.msra.mxu0 0.0
        %735 = vmatprep.subr.mxu0 0.0
        %736 = vmatpush1.msra.mxu0 0.0
        %737 = vmatprep.subr.mxu0 0.0
        %738 = vmatpush1.msra.mxu0 0.0
        %739 = vmatprep.subr.mxu0 0.0
        %740 = vmatpush1.msra.mxu0 0.0
        %741 = vmatprep.subr.mxu0 0.0
        %742 = vmatpush1.msra.mxu0 0.0
        %743 = vmatprep.subr.mxu0 0.0
        %744 = vmatpush1.msra.mxu0 0.0
        %745 = vmatprep.subr.mxu0 0.0
        %746 = vmatpush1.msra.mxu0 0.0
        %747 = vmatprep.subr.mxu0 0.0
        %748 = vmatpush1.msra.mxu0 0.0
        %749 = vmatprep.subr.mxu0 0.0
        %750 = vmatpush1.msra.mxu0 0.0
        %751 = vmatprep.subr.mxu0 0.0
        %752 = vmatpush1.msra.mxu0 0.0
        %753 = vmatprep.subr.mxu0 0.0
        %754 = vmatpush1.msra.mxu0 0.0
        %755 = vmatprep.subr.mxu0 0.0
        %756 = vmatpush1.msra.mxu0 0.0
        %757 = vmatprep.subr.mxu0 0.0
        %758 = vmatpush1.msra.mxu0 0.0
        %759 = vmatprep.subr.mxu0 0.0
        %760 = vmatpush1.msra.mxu0 0.0
        %761 = vmatprep.subr.mxu0 0.0
        %762 = vmatpush1.msra.mxu0 0.0
        %763 = vmatprep.subr.mxu0 0.0
        %764 = vmatpush1.msra.mxu0 0.0
        %765 = vmatprep.subr.mxu0 0.0
        %766 = vmatpush1.msra.mxu0 0.0
        %767 = vmatprep.subr.mxu0 0.0
        %768 = vmatpush1.msra.mxu0 0.0
        %769 = vmatprep.subr.mxu0 0.0
        %770 = vmatpush1.msra.mxu0 0.0
        %771 = vmatprep.subr.mxu0 0.0
        %772 = vmatpush1.msra.mxu0 0.0
        %773 = vmatprep.subr.mxu0 0.0
        %774 = vmatpush1.msra.mxu0 0.0
        %775 = vmatprep.subr.mxu0 0.0
        %776 = vmatpush1.msra.mxu0 0.0
        %777 = vmatprep.subr.mxu0 0.0
        %778 = vmatpush1.msra.mxu0 0.0
        %779 = vmatprep.subr.mxu0 0.0
        %780 = vmatpush1.msra.mxu0 0.0
        %781 = vmatprep.subr.mxu0 0.0
        %782 = vmatpush1.msra.mxu0 0.0
        %783 = vmatprep.subr.mxu0 0.0
        %784 = vmatpush1.msra.mxu0 0.0
        %785 = vmatprep.subr.mxu0 0.0
        %786 = vmatpush1.msra.mxu0 0.0
        %787 = vmatprep.mubr.f32.mxu0 0.0
        %788 = vmatmul.mubr.f32.gmra.mrb[0].mxu0 %v511
        %v789 = vpop.f32.mrb[0].mxu0
        %v790 = vadd.f32 %v504, %v789
        %v791 = vpop.f32.mrb[0].mxu0
        %792 = vdwg.mxu0
        %794 = vrot.lane.b32.xlu0 %v580, 120
        %v795 = vpop.permute.xlu0 %794
        %vm796 = vcmask 64512
        %v797 = vsel %vm796, %v580, 0
        %v799 = vsel %vm796, %v795, 0
        %801 = vmatprep.subr.mxu0 0.0
        %802 = vmatpush1.xpose.msra.mxu0 %v799
        %803 = vmatprep.subr.mxu0 0.0
        %804 = vmatpush1.xpose.msra.mxu0 0.0
        %805 = vmatprep.subr.mxu0 0.0
        %806 = vmatpush1.xpose.msra.mxu0 0.0
        %807 = vmatprep.subr.mxu0 0.0
        %808 = vmatpush1.xpose.msra.mxu0 0.0
        %809 = vmatprep.subr.mxu0 0.0
        %810 = vmatpush1.xpose.msra.mxu0 0.0
        %811 = vmatprep.subr.mxu0 0.0
        %812 = vmatpush1.xpose.msra.mxu0 0.0
        %813 = vmatprep.subr.mxu0 0.0
        %814 = vmatpush1.xpose.msra.mxu0 0.0
        %815 = vmatprep.subr.mxu0 0.0
        %816 = vmatpush1.xpose.msra.mxu0 0.0
        %817 = vmatprep.subr.mxu0 0.0
        %818 = vmatpush1.xpose.msra.mxu0 0.0
        %819 = vmatprep.subr.mxu0 0.0
        %820 = vmatpush1.xpose.msra.mxu0 0.0
        %821 = vmatprep.subr.mxu0 0.0
        %822 = vmatpush1.xpose.msra.mxu0 0.0
        %823 = vmatprep.subr.mxu0 0.0
        %824 = vmatpush1.xpose.msra.mxu0 0.0
        %825 = vmatprep.subr.mxu0 0.0
        %826 = vmatpush1.xpose.msra.mxu0 0.0
        %827 = vmatprep.subr.mxu0 0.0
        %828 = vmatpush1.xpose.msra.mxu0 0.0
        %829 = vmatprep.subr.mxu0 0.0
        %830 = vmatpush1.xpose.msra.mxu0 0.0
        %831 = vmatprep.subr.mxu0 0.0
        %832 = vmatpush1.xpose.msra.mxu0 0.0
        %833 = vmatprep.subr.mxu0 0.0
        %834 = vmatpush1.xpose.msra.mxu0 0.0
        %835 = vmatprep.subr.mxu0 0.0
        %836 = vmatpush1.xpose.msra.mxu0 0.0
        %837 = vmatprep.subr.mxu0 0.0
        %838 = vmatpush1.xpose.msra.mxu0 0.0
        %839 = vmatprep.subr.mxu0 0.0
        %840 = vmatpush1.xpose.msra.mxu0 0.0
        %841 = vmatprep.subr.mxu0 0.0
        %842 = vmatpush1.xpose.msra.mxu0 0.0
        %843 = vmatprep.subr.mxu0 0.0
        %844 = vmatpush1.xpose.msra.mxu0 0.0
        %845 = vmatprep.subr.mxu0 0.0
        %846 = vmatpush1.xpose.msra.mxu0 0.0
        %847 = vmatprep.subr.mxu0 0.0
        %848 = vmatpush1.xpose.msra.mxu0 0.0
        %849 = vmatprep.subr.mxu0 0.0
        %850 = vmatpush1.xpose.msra.mxu0 0.0
        %851 = vmatprep.subr.mxu0 0.0
        %852 = vmatpush1.xpose.msra.mxu0 0.0
        %853 = vmatprep.subr.mxu0 0.0
        %854 = vmatpush1.xpose.msra.mxu0 0.0
        %855 = vmatprep.subr.mxu0 0.0
        %856 = vmatpush1.xpose.msra.mxu0 0.0
        %857 = vmatprep.subr.mxu0 0.0
        %858 = vmatpush1.xpose.msra.mxu0 0.0
        %859 = vmatprep.subr.mxu0 0.0
        %860 = vmatpush1.xpose.msra.mxu0 0.0
        %861 = vmatprep.subr.mxu0 0.0
        %862 = vmatpush1.xpose.msra.mxu0 0.0
        %863 = vmatprep.subr.mxu0 0.0
        %864 = vmatpush1.xpose.msra.mxu0 0.0
        %865 = vmatprep.mubr.f32.mxu0 0.0
        %866 = vmatmul.mubr.f32.gmra.mrb[0].mxu0 %v797
        %v867 = vpop.f32.mrb[0].mxu0
        %v868 = vadd.f32 0.0, %v867
        %v869 = vpop.f32.mrb[0].mxu0
        %870 = vdwg.mxu0
        %872 = vrot.lane.b32.xlu0 %v650, 120
        %v873 = vpop.permute.xlu0 %872
        %v874 = vsel %vm796, %v650, 0
        %v876 = vsel %vm796, %v873, 0
        %878 = vmatprep.subr.mxu0 0.0
        %879 = vmatpush1.xpose.msra.mxu0 %v876
        %880 = vmatprep.subr.mxu0 0.0
        %881 = vmatpush1.xpose.msra.mxu0 0.0
        %882 = vmatprep.subr.mxu0 0.0
        %883 = vmatpush1.xpose.msra.mxu0 0.0
        %884 = vmatprep.subr.mxu0 0.0
        %885 = vmatpush1.xpose.msra.mxu0 0.0
        %886 = vmatprep.subr.mxu0 0.0
        %887 = vmatpush1.xpose.msra.mxu0 0.0
        %888 = vmatprep.subr.mxu0 0.0
        %889 = vmatpush1.xpose.msra.mxu0 0.0
        %890 = vmatprep.subr.mxu0 0.0
        %891 = vmatpush1.xpose.msra.mxu0 0.0
        %892 = vmatprep.subr.mxu0 0.0
        %893 = vmatpush1.xpose.msra.mxu0 0.0
        %894 = vmatprep.subr.mxu0 0.0
        %895 = vmatpush1.xpose.msra.mxu0 0.0
        %896 = vmatprep.subr.mxu0 0.0
        %897 = vmatpush1.xpose.msra.mxu0 0.0
        %898 = vmatprep.subr.mxu0 0.0
        %899 = vmatpush1.xpose.msra.mxu0 0.0
        %900 = vmatprep.subr.mxu0 0.0
        %901 = vmatpush1.xpose.msra.mxu0 0.0
        %902 = vmatprep.subr.mxu0 0.0
        %903 = vmatpush1.xpose.msra.mxu0 0.0
        %904 = vmatprep.subr.mxu0 0.0
        %905 = vmatpush1.xpose.msra.mxu0 0.0
        %906 = vmatprep.subr.mxu0 0.0
        %907 = vmatpush1.xpose.msra.mxu0 0.0
        %908 = vmatprep.subr.mxu0 0.0
        %909 = vmatpush1.xpose.msra.mxu0 0.0
        %910 = vmatprep.subr.mxu0 0.0
        %911 = vmatpush1.xpose.msra.mxu0 0.0
        %912 = vmatprep.subr.mxu0 0.0
        %913 = vmatpush1.xpose.msra.mxu0 0.0
        %914 = vmatprep.subr.mxu0 0.0
        %915 = vmatpush1.xpose.msra.mxu0 0.0
        %916 = vmatprep.subr.mxu0 0.0
        %917 = vmatpush1.xpose.msra.mxu0 0.0
        %918 = vmatprep.subr.mxu0 0.0
        %919 = vmatpush1.xpose.msra.mxu0 0.0
        %920 = vmatprep.subr.mxu0 0.0
        %921 = vmatpush1.xpose.msra.mxu0 0.0
        %922 = vmatprep.subr.mxu0 0.0
        %923 = vmatpush1.xpose.msra.mxu0 0.0
        %924 = vmatprep.subr.mxu0 0.0
        %925 = vmatpush1.xpose.msra.mxu0 0.0
        %926 = vmatprep.subr.mxu0 0.0
        %927 = vmatpush1.xpose.msra.mxu0 0.0
        %928 = vmatprep.subr.mxu0 0.0
        %929 = vmatpush1.xpose.msra.mxu0 0.0
        %930 = vmatprep.subr.mxu0 0.0
        %931 = vmatpush1.xpose.msra.mxu0 0.0
        %932 = vmatprep.subr.mxu0 0.0
        %933 = vmatpush1.xpose.msra.mxu0 0.0
        %934 = vmatprep.subr.mxu0 0.0
        %935 = vmatpush1.xpose.msra.mxu0 0.0
        %936 = vmatprep.subr.mxu0 0.0
        %937 = vmatpush1.xpose.msra.mxu0 0.0
        %938 = vmatprep.subr.mxu0 0.0
        %939 = vmatpush1.xpose.msra.mxu0 0.0
        %940 = vmatprep.subr.mxu0 0.0
        %941 = vmatpush1.xpose.msra.mxu0 0.0
        %942 = vmatprep.mubr.f32.mxu0 0.0
        %943 = vmatmul.mubr.f32.gmra.mrb[0].mxu0 %v874
        %v944 = vpop.f32.mrb[0].mxu0
        %v945 = vadd.f32 0.0, %v944
        %v946 = vpop.f32.mrb[0].mxu0
        %947 = vdwg.mxu0
        %949 = vrot.lane.b32.xlu0 %v720, 120
        %v950 = vpop.permute.xlu0 %949
        %v951 = vsel %vm796, %v720, 0
        %v953 = vsel %vm796, %v950, 0
        %955 = vmatprep.subr.mxu0 0.0
        %956 = vmatpush1.xpose.msra.mxu0 %v953
        %957 = vmatprep.subr.mxu0 0.0
        %958 = vmatpush1.xpose.msra.mxu0 0.0
        %959 = vmatprep.subr.mxu0 0.0
        %960 = vmatpush1.xpose.msra.mxu0 0.0
        %961 = vmatprep.subr.mxu0 0.0
        %962 = vmatpush1.xpose.msra.mxu0 0.0
        %963 = vmatprep.subr.mxu0 0.0
        %964 = vmatpush1.xpose.msra.mxu0 0.0
        %965 = vmatprep.subr.mxu0 0.0
        %966 = vmatpush1.xpose.msra.mxu0 0.0
        %967 = vmatprep.subr.mxu0 0.0
        %968 = vmatpush1.xpose.msra.mxu0 0.0
        %969 = vmatprep.subr.mxu0 0.0
        %970 = vmatpush1.xpose.msra.mxu0 0.0
        %971 = vmatprep.subr.mxu0 0.0
        %972 = vmatpush1.xpose.msra.mxu0 0.0
        %973 = vmatprep.subr.mxu0 0.0
        %974 = vmatpush1.xpose.msra.mxu0 0.0
        %975 = vmatprep.subr.mxu0 0.0
        %976 = vmatpush1.xpose.msra.mxu0 0.0
        %977 = vmatprep.subr.mxu0 0.0
        %978 = vmatpush1.xpose.msra.mxu0 0.0
        %979 = vmatprep.subr.mxu0 0.0
        %980 = vmatpush1.xpose.msra.mxu0 0.0
        %981 = vmatprep.subr.mxu0 0.0
        %982 = vmatpush1.xpose.msra.mxu0 0.0
        %983 = vmatprep.subr.mxu0 0.0
        %984 = vmatpush1.xpose.msra.mxu0 0.0
        %985 = vmatprep.subr.mxu0 0.0
        %986 = vmatpush1.xpose.msra.mxu0 0.0
        %987 = vmatprep.subr.mxu0 0.0
        %988 = vmatpush1.xpose.msra.mxu0 0.0
        %989 = vmatprep.subr.mxu0 0.0
        %990 = vmatpush1.xpose.msra.mxu0 0.0
        %991 = vmatprep.subr.mxu0 0.0
        %992 = vmatpush1.xpose.msra.mxu0 0.0
        %993 = vmatprep.subr.mxu0 0.0
        %994 = vmatpush1.xpose.msra.mxu0 0.0
        %995 = vmatprep.subr.mxu0 0.0
        %996 = vmatpush1.xpose.msra.mxu0 0.0
        %997 = vmatprep.subr.mxu0 0.0
        %998 = vmatpush1.xpose.msra.mxu0 0.0
        %999 = vmatprep.subr.mxu0 0.0
        %1000 = vmatpush1.xpose.msra.mxu0 0.0
        %1001 = vmatprep.subr.mxu0 0.0
        %1002 = vmatpush1.xpose.msra.mxu0 0.0
        %1003 = vmatprep.subr.mxu0 0.0
        %1004 = vmatpush1.xpose.msra.mxu0 0.0
        %1005 = vmatprep.subr.mxu0 0.0
        %1006 = vmatpush1.xpose.msra.mxu0 0.0
        %1007 = vmatprep.subr.mxu0 0.0
        %1008 = vmatpush1.xpose.msra.mxu0 0.0
        %1009 = vmatprep.subr.mxu0 0.0
        %1010 = vmatpush1.xpose.msra.mxu0 0.0
        %1011 = vmatprep.subr.mxu0 0.0
        %1012 = vmatpush1.xpose.msra.mxu0 0.0
        %1013 = vmatprep.subr.mxu0 0.0
        %1014 = vmatpush1.xpose.msra.mxu0 0.0
        %1015 = vmatprep.subr.mxu0 0.0
        %1016 = vmatpush1.xpose.msra.mxu0 0.0
        %1017 = vmatprep.subr.mxu0 0.0
        %1018 = vmatpush1.xpose.msra.mxu0 0.0
        %1019 = vmatprep.mubr.f32.mxu0 0.0
        %1020 = vmatmul.mubr.f32.gmra.mrb[0].mxu0 %v951
        %v1021 = vpop.f32.mrb[0].mxu0
        %v1022 = vadd.f32 0.0, %v1021
        %v1023 = vpop.f32.mrb[0].mxu0
        %1024 = vdwg.mxu0
        %1026 = vrot.lane.b32.xlu0 %v790, 120
        %v1027 = vpop.permute.xlu0 %1026
        %v1028 = vsel %vm796, %v790, 0
        %v1030 = vsel %vm796, %v1027, 0
        %1032 = vmatprep.subr.mxu0 0.0
        %1033 = vmatpush1.xpose.msra.mxu0 %v1030
        %1034 = vmatprep.subr.mxu0 0.0
        %1035 = vmatpush1.xpose.msra.mxu0 0.0
        %1036 = vmatprep.subr.mxu0 0.0
        %1037 = vmatpush1.xpose.msra.mxu0 0.0
        %1038 = vmatprep.subr.mxu0 0.0
        %1039 = vmatpush1.xpose.msra.mxu0 0.0
        %1040 = vmatprep.subr.mxu0 0.0
        %1041 = vmatpush1.xpose.msra.mxu0 0.0
        %1042 = vmatprep.subr.mxu0 0.0
        %1043 = vmatpush1.xpose.msra.mxu0 0.0
        %1044 = vmatprep.subr.mxu0 0.0
        %1045 = vmatpush1.xpose.msra.mxu0 0.0
        %1046 = vmatprep.subr.mxu0 0.0
        %1047 = vmatpush1.xpose.msra.mxu0 0.0
        %1048 = vmatprep.subr.mxu0 0.0
        %1049 = vmatpush1.xpose.msra.mxu0 0.0
        %1050 = vmatprep.subr.mxu0 0.0
        %1051 = vmatpush1.xpose.msra.mxu0 0.0
        %1052 = vmatprep.subr.mxu0 0.0
        %1053 = vmatpush1.xpose.msra.mxu0 0.0
        %1054 = vmatprep.subr.mxu0 0.0
        %1055 = vmatpush1.xpose.msra.mxu0 0.0
        %1056 = vmatprep.subr.mxu0 0.0
        %1057 = vmatpush1.xpose.msra.mxu0 0.0
        %1058 = vmatprep.subr.mxu0 0.0
        %1059 = vmatpush1.xpose.msra.mxu0 0.0
        %1060 = vmatprep.subr.mxu0 0.0
        %1061 = vmatpush1.xpose.msra.mxu0 0.0
        %1062 = vmatprep.subr.mxu0 0.0
        %1063 = vmatpush1.xpose.msra.mxu0 0.0
        %1064 = vmatprep.subr.mxu0 0.0
        %1065 = vmatpush1.xpose.msra.mxu0 0.0
        %1066 = vmatprep.subr.mxu0 0.0
        %1067 = vmatpush1.xpose.msra.mxu0 0.0
        %1068 = vmatprep.subr.mxu0 0.0
        %1069 = vmatpush1.xpose.msra.mxu0 0.0
        %1070 = vmatprep.subr.mxu0 0.0
        %1071 = vmatpush1.xpose.msra.mxu0 0.0
        %1072 = vmatprep.subr.mxu0 0.0
        %1073 = vmatpush1.xpose.msra.mxu0 0.0
        %1074 = vmatprep.subr.mxu0 0.0
        %1075 = vmatpush1.xpose.msra.mxu0 0.0
        %1076 = vmatprep.subr.mxu0 0.0
        %1077 = vmatpush1.xpose.msra.mxu0 0.0
        %1078 = vmatprep.subr.mxu0 0.0
        %1079 = vmatpush1.xpose.msra.mxu0 0.0
        %1080 = vmatprep.subr.mxu0 0.0
        %1081 = vmatpush1.xpose.msra.mxu0 0.0
        %1082 = vmatprep.subr.mxu0 0.0
        %1083 = vmatpush1.xpose.msra.mxu0 0.0
        %1084 = vmatprep.subr.mxu0 0.0
        %1085 = vmatpush1.xpose.msra.mxu0 0.0
        %1086 = vmatprep.subr.mxu0 0.0
        %1087 = vmatpush1.xpose.msra.mxu0 0.0
        %1088 = vmatprep.subr.mxu0 0.0
        %1089 = vmatpush1.xpose.msra.mxu0 0.0
        %1090 = vmatprep.subr.mxu0 0.0
        %1091 = vmatpush1.xpose.msra.mxu0 0.0
        %1092 = vmatprep.subr.mxu0 0.0
        %1093 = vmatpush1.xpose.msra.mxu0 0.0
        %1094 = vmatprep.subr.mxu0 0.0
        %1095 = vmatpush1.xpose.msra.mxu0 0.0
        %1096 = vmatprep.mubr.f32.mxu0 0.0
        %1097 = vmatmul.mubr.f32.gmra.mrb[0].mxu0 %v1028
        %v1098 = vpop.f32.mrb[0].mxu0
        %v1099 = vadd.f32 0.0, %v1098
        %v1100 = vpop.f32.mrb[0].mxu0
        %1101 = vdwg.mxu0
        %v1102 = vmul.f32 %v868, 0.35355338
        %v1103 = vmul.f32 %v945, 0.35355338
        %v1104 = vmul.f32 %v1022, 0.35355338
        %v1105 = vmul.f32 %v1099, 0.35355338
        %v1106 = vld [vmem:[%s463] sm:$0xff]
        %v1107 = vadd.f32 %v1102, %v1106
        %v1108 = vadd.f32 %v1103, %v1106
        %v1109 = vadd.f32 %v1104, %v1106
        %v1110 = vadd.f32 %v1105, %v1106
        %v1111 = vsel %vm796, %v1107, -inf
        %1112 = vmax.xlane.f32.xlu0 %v1111
        %v1113 = vpop.xlane.xlu0 %1112
        %v1114 = vsel %vm796, %v1108, -inf
        %1115 = vmax.xlane.f32.xlu0 %v1114
        %v1116 = vpop.xlane.xlu0 %1115
        %v1117 = vsel %vm796, %v1109, -inf
        %1118 = vmax.xlane.f32.xlu0 %v1117
        %v1119 = vpop.xlane.xlu0 %1118
        %v1120 = vsel %vm796, %v1110, -inf
        %1121 = vmax.xlane.f32.xlu0 %v1120
        %v1122 = vpop.xlane.xlu0 %1121
        %v1123 = vsub.f32 %v1107, %v1113
        %v1124 = vsub.f32 %v1108, %v1116
        %v1125 = vsub.f32 %v1109, %v1119
        %v1126 = vsub.f32 %v1110, %v1122
        %v1127 = vmul.f32 %v1123, 1.442695
        %v1128 = vpow.pop %v1127
        %v1129 = vmul.f32 %v1124, 1.442695
        %v1130 = vpow.pop %v1129
        %v1131 = vmul.f32 %v1125, 1.442695
        %v1132 = vpow.pop %v1131
        %v1133 = vmul.f32 %v1126, 1.442695
        %v1134 = vpow.pop %v1133
        %v1135 = vsel %vm796, %v1128, 0.0
        %1136 = vadd.xlane.f32.xlu0 %v1135
        %v1137 = vpop.xlane.xlu0 %1136
        %v1138 = vsel %vm796, %v1130, 0.0
        %1139 = vadd.xlane.f32.xlu0 %v1138
        %v1140 = vpop.xlane.xlu0 %1139
        %v1141 = vsel %vm796, %v1132, 0.0
        %1142 = vadd.xlane.f32.xlu0 %v1141
        %v1143 = vpop.xlane.xlu0 %1142
        %v1144 = vsel %vm796, %v1134, 0.0
        %1145 = vadd.xlane.f32.xlu0 %v1144
        %v1146 = vpop.xlane.xlu0 %1145
        %v1147 = vrcp.pop %v1137
        %v1148 = vrcp.pop %v1140
        %v1149 = vrcp.pop %v1143
        %v1150 = vrcp.pop %v1146
        %v1151 = vmul.f32 %v1137, %v1147
        %v1152 = vmul.f32 %v1140, %v1148
        %v1153 = vmul.f32 %v1143, %v1149
        %v1154 = vmul.f32 %v1146, %v1150
        %v1155 = vsub.f32 2.0, %v1151
        %v1156 = vsub.f32 2.0, %v1152
        %v1157 = vsub.f32 2.0, %v1153
        %v1158 = vsub.f32 2.0, %v1154
        %v1159 = vmul.f32 %v1147, %v1155
        %v1160 = vmul.f32 %v1148, %v1156
        %v1161 = vmul.f32 %v1149, %v1157
        %v1162 = vmul.f32 %v1150, %v1158
        %v1163 = vmul.f32 %v1128, %v1159
        %v1164 = vmul.f32 %v1130, %v1160
        %v1165 = vmul.f32 %v1132, %v1161
        %v1166 = vmul.f32 %v1134, %v1162
        %1167 = vst.msk [vmem:[%s455] sm:$0xff] %vm796, %v1163
        %1168 = vst.msk [vmem:[%s455 + $0x8] sm:$0xff] %vm796, %v1164
        %1169 = vst.msk [vmem:[%s455 + $0x10] sm:$0xff] %vm796, %v1165
        %1170 = vst.msk [vmem:[%s455 + $0x18] sm:$0xff] %vm796, %v1166
        %1171 = vrot.lane.b32.xlu0 %v580, 112
        %v1172 = vpop.permute.xlu0 %1171
        %v1175 = vsel %vm796, %v1163, 0
        %1177 = vmatprep.subr.mxu0 0.0
        %1178 = vmatpush1.msra.mxu0 %v1172
        %1179 = vmatprep.subr.mxu0 0.0
        %1180 = vmatpush1.msra.mxu0 0.0
        %1181 = vmatprep.subr.mxu0 0.0
        %1182 = vmatpush1.msra.mxu0 0.0
        %1183 = vmatprep.subr.mxu0 0.0
        %1184 = vmatpush1.msra.mxu0 0.0
        %1185 = vmatprep.subr.mxu0 0.0
        %1186 = vmatpush1.msra.mxu0 0.0
        %1187 = vmatprep.subr.mxu0 0.0
        %1188 = vmatpush1.msra.mxu0 0.0
        %1189 = vmatprep.subr.mxu0 0.0
        %1190 = vmatpush1.msra.mxu0 0.0
        %1191 = vmatprep.subr.mxu0 0.0
        %1192 = vmatpush1.msra.mxu0 0.0
        %1193 = vmatprep.subr.mxu0 0.0
        %1194 = vmatpush1.msra.mxu0 0.0
        %1195 = vmatprep.subr.mxu0 0.0
        %1196 = vmatpush1.msra.mxu0 0.0
        %1197 = vmatprep.subr.mxu0 0.0
        %1198 = vmatpush1.msra.mxu0 0.0
        %1199 = vmatprep.subr.mxu0 0.0
        %1200 = vmatpush1.msra.mxu0 0.0
        %1201 = vmatprep.subr.mxu0 0.0
        %1202 = vmatpush1.msra.mxu0 0.0
        %1203 = vmatprep.subr.mxu0 0.0
        %1204 = vmatpush1.msra.mxu0 0.0
        %1205 = vmatprep.subr.mxu0 0.0
        %1206 = vmatpush1.msra.mxu0 0.0
        %1207 = vmatprep.subr.mxu0 0.0
        %1208 = vmatpush1.msra.mxu0 0.0
        %1209 = vmatprep.subr.mxu0 0.0
        %1210 = vmatpush1.msra.mxu0 0.0
        %1211 = vmatprep.subr.mxu0 0.0
        %1212 = vmatpush1.msra.mxu0 0.0
        %1213 = vmatprep.subr.mxu0 0.0
        %1214 = vmatpush1.msra.mxu0 0.0
        %1215 = vmatprep.subr.mxu0 0.0
        %1216 = vmatpush1.msra.mxu0 0.0
        %1217 = vmatprep.subr.mxu0 0.0
        %1218 = vmatpush1.msra.mxu0 0.0
        %1219 = vmatprep.subr.mxu0 0.0
        %1220 = vmatpush1.msra.mxu0 0.0
        %1221 = vmatprep.subr.mxu0 0.0
        %1222 = vmatpush1.msra.mxu0 0.0
        %1223 = vmatprep.subr.mxu0 0.0
        %1224 = vmatpush1.msra.mxu0 0.0
        %1225 = vmatprep.subr.mxu0 0.0
        %1226 = vmatpush1.msra.mxu0 0.0
        %1227 = vmatprep.subr.mxu0 0.0
        %1228 = vmatpush1.msra.mxu0 0.0
        %1229 = vmatprep.subr.mxu0 0.0
        %1230 = vmatpush1.msra.mxu0 0.0
        %1231 = vmatprep.subr.mxu0 0.0
        %1232 = vmatpush1.msra.mxu0 0.0
        %1233 = vmatprep.subr.mxu0 0.0
        %1234 = vmatpush1.msra.mxu0 0.0
        %1235 = vmatprep.subr.mxu0 0.0
        %1236 = vmatpush1.msra.mxu0 0.0
        %1237 = vmatprep.subr.mxu0 0.0
        %1238 = vmatpush1.msra.mxu0 0.0
        %1239 = vmatprep.subr.mxu0 0.0
        %1240 = vmatpush1.msra.mxu0 0.0
        %1241 = vmatprep.mubr.f32.mxu0 0.0
        %1242 = vmatmul.mubr.f32.gmra.mrb[0].mxu0 %v1175
        %v1243 = vpop.f32.mrb[0].mxu0
        %v1244 = vadd.f32 0.0, %v1243
        %v1245 = vpop.f32.mrb[0].mxu0
        %1246 = vdwg.mxu0
        %1247 = vrot.lane.b32.xlu0 %v650, 112
        %v1248 = vpop.permute.xlu0 %1247
        %v1251 = vsel %vm796, %v1164, 0
        %1253 = vmatprep.subr.mxu0 0.0
        %1254 = vmatpush1.msra.mxu0 %v1248
        %1255 = vmatprep.subr.mxu0 0.0
        %1256 = vmatpush1.msra.mxu0 0.0
        %1257 = vmatprep.subr.mxu0 0.0
        %1258 = vmatpush1.msra.mxu0 0.0
        %1259 = vmatprep.subr.mxu0 0.0
        %1260 = vmatpush1.msra.mxu0 0.0
        %1261 = vmatprep.subr.mxu0 0.0
        %1262 = vmatpush1.msra.mxu0 0.0
        %1263 = vmatprep.subr.mxu0 0.0
        %1264 = vmatpush1.msra.mxu0 0.0
        %1265 = vmatprep.subr.mxu0 0.0
        %1266 = vmatpush1.msra.mxu0 0.0
        %1267 = vmatprep.subr.mxu0 0.0
        %1268 = vmatpush1.msra.mxu0 0.0
        %1269 = vmatprep.subr.mxu0 0.0
        %1270 = vmatpush1.msra.mxu0 0.0
        %1271 = vmatprep.subr.mxu0 0.0
        %1272 = vmatpush1.msra.mxu0 0.0
        %1273 = vmatprep.subr.mxu0 0.0
        %1274 = vmatpush1.msra.mxu0 0.0
        %1275 = vmatprep.subr.mxu0 0.0
        %1276 = vmatpush1.msra.mxu0 0.0
        %1277 = vmatprep.subr.mxu0 0.0
        %1278 = vmatpush1.msra.mxu0 0.0
        %1279 = vmatprep.subr.mxu0 0.0
        %1280 = vmatpush1.msra.mxu0 0.0
        %1281 = vmatprep.subr.mxu0 0.0
        %1282 = vmatpush1.msra.mxu0 0.0
        %1283 = vmatprep.subr.mxu0 0.0
        %1284 = vmatpush1.msra.mxu0 0.0
        %1285 = vmatprep.subr.mxu0 0.0
        %1286 = vmatpush1.msra.mxu0 0.0
        %1287 = vmatprep.subr.mxu0 0.0
        %1288 = vmatpush1.msra.mxu0 0.0
        %1289 = vmatprep.subr.mxu0 0.0
        %1290 = vmatpush1.msra.mxu0 0.0
        %1291 = vmatprep.subr.mxu0 0.0
        %1292 = vmatpush1.msra.mxu0 0.0
        %1293 = vmatprep.subr.mxu0 0.0
        %1294 = vmatpush1.msra.mxu0 0.0
        %1295 = vmatprep.subr.mxu0 0.0
        %1296 = vmatpush1.msra.mxu0 0.0
        %1297 = vmatprep.subr.mxu0 0.0
        %1298 = vmatpush1.msra.mxu0 0.0
        %1299 = vmatprep.subr.mxu0 0.0
        %1300 = vmatpush1.msra.mxu0 0.0
        %1301 = vmatprep.subr.mxu0 0.0
        %1302 = vmatpush1.msra.mxu0 0.0
        %1303 = vmatprep.subr.mxu0 0.0
        %1304 = vmatpush1.msra.mxu0 0.0
        %1305 = vmatprep.subr.mxu0 0.0
        %1306 = vmatpush1.msra.mxu0 0.0
        %1307 = vmatprep.subr.mxu0 0.0
        %1308 = vmatpush1.msra.mxu0 0.0
        %1309 = vmatprep.subr.mxu0 0.0
        %1310 = vmatpush1.msra.mxu0 0.0
        %1311 = vmatprep.subr.mxu0 0.0
        %1312 = vmatpush1.msra.mxu0 0.0
        %1313 = vmatprep.subr.mxu0 0.0
        %1314 = vmatpush1.msra.mxu0 0.0
        %1315 = vmatprep.subr.mxu0 0.0
        %1316 = vmatpush1.msra.mxu0 0.0
        %1317 = vmatprep.mubr.f32.mxu0 0.0
        %1318 = vmatmul.mubr.f32.gmra.mrb[0].mxu0 %v1251
        %v1319 = vpop.f32.mrb[0].mxu0
        %v1320 = vadd.f32 0.0, %v1319
        %v1321 = vpop.f32.mrb[0].mxu0
        %1322 = vdwg.mxu0
        %1323 = vrot.lane.b32.xlu0 %v720, 112
        %v1324 = vpop.permute.xlu0 %1323
        %v1327 = vsel %vm796, %v1165, 0
        %1329 = vmatprep.subr.mxu0 0.0
        %1330 = vmatpush1.msra.mxu0 %v1324
        %1331 = vmatprep.subr.mxu0 0.0
        %1332 = vmatpush1.msra.mxu0 0.0
        %1333 = vmatprep.subr.mxu0 0.0
        %1334 = vmatpush1.msra.mxu0 0.0
        %1335 = vmatprep.subr.mxu0 0.0
        %1336 = vmatpush1.msra.mxu0 0.0
        %1337 = vmatprep.subr.mxu0 0.0
        %1338 = vmatpush1.msra.mxu0 0.0
        %1339 = vmatprep.subr.mxu0 0.0
        %1340 = vmatpush1.msra.mxu0 0.0
        %1341 = vmatprep.subr.mxu0 0.0
        %1342 = vmatpush1.msra.mxu0 0.0
        %1343 = vmatprep.subr.mxu0 0.0
        %1344 = vmatpush1.msra.mxu0 0.0
        %1345 = vmatprep.subr.mxu0 0.0
        %1346 = vmatpush1.msra.mxu0 0.0
        %1347 = vmatprep.subr.mxu0 0.0
        %1348 = vmatpush1.msra.mxu0 0.0
        %1349 = vmatprep.subr.mxu0 0.0
        %1350 = vmatpush1.msra.mxu0 0.0
        %1351 = vmatprep.subr.mxu0 0.0
        %1352 = vmatpush1.msra.mxu0 0.0
        %1353 = vmatprep.subr.mxu0 0.0
        %1354 = vmatpush1.msra.mxu0 0.0
        %1355 = vmatprep.subr.mxu0 0.0
        %1356 = vmatpush1.msra.mxu0 0.0
        %1357 = vmatprep.subr.mxu0 0.0
        %1358 = vmatpush1.msra.mxu0 0.0
        %1359 = vmatprep.subr.mxu0 0.0
        %1360 = vmatpush1.msra.mxu0 0.0
        %1361 = vmatprep.subr.mxu0 0.0
        %1362 = vmatpush1.msra.mxu0 0.0
        %1363 = vmatprep.subr.mxu0 0.0
        %1364 = vmatpush1.msra.mxu0 0.0
        %1365 = vmatprep.subr.mxu0 0.0
        %1366 = vmatpush1.msra.mxu0 0.0
        %1367 = vmatprep.subr.mxu0 0.0
        %1368 = vmatpush1.msra.mxu0 0.0
        %1369 = vmatprep.subr.mxu0 0.0
        %1370 = vmatpush1.msra.mxu0 0.0
        %1371 = vmatprep.subr.mxu0 0.0
        %1372 = vmatpush1.msra.mxu0 0.0
        %1373 = vmatprep.subr.mxu0 0.0
        %1374 = vmatpush1.msra.mxu0 0.0
        %1375 = vmatprep.subr.mxu0 0.0
        %1376 = vmatpush1.msra.mxu0 0.0
        %1377 = vmatprep.subr.mxu0 0.0
        %1378 = vmatpush1.msra.mxu0 0.0
        %1379 = vmatprep.subr.mxu0 0.0
        %1380 = vmatpush1.msra.mxu0 0.0
        %1381 = vmatprep.subr.mxu0 0.0
        %1382 = vmatpush1.msra.mxu0 0.0
        %1383 = vmatprep.subr.mxu0 0.0
        %1384 = vmatpush1.msra.mxu0 0.0
        %1385 = vmatprep.subr.mxu0 0.0
        %1386 = vmatpush1.msra.mxu0 0.0
        %1387 = vmatprep.subr.mxu0 0.0
        %1388 = vmatpush1.msra.mxu0 0.0
        %1389 = vmatprep.subr.mxu0 0.0
        %1390 = vmatpush1.msra.mxu0 0.0
        %1391 = vmatprep.subr.mxu0 0.0
        %1392 = vmatpush1.msra.mxu0 0.0
        %1393 = vmatprep.mubr.f32.mxu0 0.0
        %1394 = vmatmul.mubr.f32.gmra.mrb[0].mxu0 %v1327
        %v1395 = vpop.f32.mrb[0].mxu0
        %v1396 = vadd.f32 0.0, %v1395
        %v1397 = vpop.f32.mrb[0].mxu0
        %1398 = vdwg.mxu0
        %1399 = vrot.lane.b32.xlu0 %v790, 112
        %v1400 = vpop.permute.xlu0 %1399
        %v1403 = vsel %vm796, %v1166, 0
        %1405 = vmatprep.subr.mxu0 0.0
        %1406 = vmatpush1.msra.mxu0 %v1400
        %1407 = vmatprep.subr.mxu0 0.0
        %1408 = vmatpush1.msra.mxu0 0.0
        %1409 = vmatprep.subr.mxu0 0.0
        %1410 = vmatpush1.msra.mxu0 0.0
        %1411 = vmatprep.subr.mxu0 0.0
        %1412 = vmatpush1.msra.mxu0 0.0
        %1413 = vmatprep.subr.mxu0 0.0
        %1414 = vmatpush1.msra.mxu0 0.0
        %1415 = vmatprep.subr.mxu0 0.0
        %1416 = vmatpush1.msra.mxu0 0.0
        %1417 = vmatprep.subr.mxu0 0.0
        %1418 = vmatpush1.msra.mxu0 0.0
        %1419 = vmatprep.subr.mxu0 0.0
        %1420 = vmatpush1.msra.mxu0 0.0
        %1421 = vmatprep.subr.mxu0 0.0
        %1422 = vmatpush1.msra.mxu0 0.0
        %1423 = vmatprep.subr.mxu0 0.0
        %1424 = vmatpush1.msra.mxu0 0.0
        %1425 = vmatprep.subr.mxu0 0.0
        %1426 = vmatpush1.msra.mxu0 0.0
        %1427 = vmatprep.subr.mxu0 0.0
        %1428 = vmatpush1.msra.mxu0 0.0
        %1429 = vmatprep.subr.mxu0 0.0
        %1430 = vmatpush1.msra.mxu0 0.0
        %1431 = vmatprep.subr.mxu0 0.0
        %1432 = vmatpush1.msra.mxu0 0.0
        %1433 = vmatprep.subr.mxu0 0.0
        %1434 = vmatpush1.msra.mxu0 0.0
        %1435 = vmatprep.subr.mxu0 0.0
        %1436 = vmatpush1.msra.mxu0 0.0
        %1437 = vmatprep.subr.mxu0 0.0
        %1438 = vmatpush1.msra.mxu0 0.0
        %1439 = vmatprep.subr.mxu0 0.0
        %1440 = vmatpush1.msra.mxu0 0.0
        %1441 = vmatprep.subr.mxu0 0.0
        %1442 = vmatpush1.msra.mxu0 0.0
        %1443 = vmatprep.subr.mxu0 0.0
        %1444 = vmatpush1.msra.mxu0 0.0
        %1445 = vmatprep.subr.mxu0 0.0
        %1446 = vmatpush1.msra.mxu0 0.0
        %1447 = vmatprep.subr.mxu0 0.0
        %1448 = vmatpush1.msra.mxu0 0.0
        %1449 = vmatprep.subr.mxu0 0.0
        %1450 = vmatpush1.msra.mxu0 0.0
        %1451 = vmatprep.subr.mxu0 0.0
        %1452 = vmatpush1.msra.mxu0 0.0
        %1453 = vmatprep.subr.mxu0 0.0
        %1454 = vmatpush1.msra.mxu0 0.0
        %1455 = vmatprep.subr.mxu0 0.0
        %1456 = vmatpush1.msra.mxu0 0.0
        %1457 = vmatprep.subr.mxu0 0.0
        %1458 = vmatpush1.msra.mxu0 0.0
        %1459 = vmatprep.subr.mxu0 0.0
        %1460 = vmatpush1.msra.mxu0 0.0
        %1461 = vmatprep.subr.mxu0 0.0
        %1462 = vmatpush1.msra.mxu0 0.0
        %1463 = vmatprep.subr.mxu0 0.0
        %1464 = vmatpush1.msra.mxu0 0.0
        %1465 = vmatprep.subr.mxu0 0.0
        %1466 = vmatpush1.msra.mxu0 0.0
        %1467 = vmatprep.subr.mxu0 0.0
        %1468 = vmatpush1.msra.mxu0 0.0
        %1469 = vmatprep.mubr.f32.mxu0 0.0
        %1470 = vmatmul.mubr.f32.gmra.mrb[0].mxu0 %v1403
        %v1471 = vpop.f32.mrb[0].mxu0
        %v1472 = vadd.f32 0.0, %v1471
        %v1473 = vpop.f32.mrb[0].mxu0
        %1474 = vdwg.mxu0
        %v1475 = vld [vmem:[%s4] sm:$0xff]
        %v1476 = vld [vmem:[%s4 + $0x8] sm:$0xff]
        %v1477 = vld [vmem:[%s4 + $0x10] sm:$0xff]
        %v1478 = vld [vmem:[%s4 + $0x18] sm:$0xff]
        %v1480 = vsel %vm796, %v1244, 0
        %1482 = vmatprep.subr.mxu0 0.0
        %1483 = vmatpush1.msra.mxu0 %v1475
        %1484 = vmatprep.subr.mxu0 0.0
        %1485 = vmatpush1.msra.mxu0 0.0
        %1486 = vmatprep.subr.mxu0 0.0
        %1487 = vmatpush1.msra.mxu0 0.0
        %1488 = vmatprep.subr.mxu0 0.0
        %1489 = vmatpush1.msra.mxu0 0.0
        %1490 = vmatprep.subr.mxu0 0.0
        %1491 = vmatpush1.msra.mxu0 0.0
        %1492 = vmatprep.subr.mxu0 0.0
        %1493 = vmatpush1.msra.mxu0 0.0
        %1494 = vmatprep.subr.mxu0 0.0
        %1495 = vmatpush1.msra.mxu0 0.0
        %1496 = vmatprep.subr.mxu0 0.0
        %1497 = vmatpush1.msra.mxu0 0.0
        %1498 = vmatprep.subr.mxu0 0.0
        %1499 = vmatpush1.msra.mxu0 0.0
        %1500 = vmatprep.subr.mxu0 0.0
        %1501 = vmatpush1.msra.mxu0 0.0
        %1502 = vmatprep.subr.mxu0 0.0
        %1503 = vmatpush1.msra.mxu0 0.0
        %1504 = vmatprep.subr.mxu0 0.0
        %1505 = vmatpush1.msra.mxu0 0.0
        %1506 = vmatprep.subr.mxu0 0.0
        %1507 = vmatpush1.msra.mxu0 0.0
        %1508 = vmatprep.subr.mxu0 0.0
        %1509 = vmatpush1.msra.mxu0 0.0
        %1510 = vmatprep.subr.mxu0 0.0
        %1511 = vmatpush1.msra.mxu0 0.0
        %1512 = vmatprep.subr.mxu0 0.0
        %1513 = vmatpush1.msra.mxu0 0.0
        %1514 = vmatprep.subr.mxu0 0.0
        %1515 = vmatpush1.msra.mxu0 0.0
        %1516 = vmatprep.subr.mxu0 0.0
        %1517 = vmatpush1.msra.mxu0 0.0
        %1518 = vmatprep.subr.mxu0 0.0
        %1519 = vmatpush1.msra.mxu0 0.0
        %1520 = vmatprep.subr.mxu0 0.0
        %1521 = vmatpush1.msra.mxu0 0.0
        %1522 = vmatprep.subr.mxu0 0.0
        %1523 = vmatpush1.msra.mxu0 0.0
        %1524 = vmatprep.subr.mxu0 0.0
        %1525 = vmatpush1.msra.mxu0 0.0
        %1526 = vmatprep.subr.mxu0 0.0
        %1527 = vmatpush1.msra.mxu0 0.0
        %1528 = vmatprep.subr.mxu0 0.0
        %1529 = vmatpush1.msra.mxu0 0.0
        %1530 = vmatprep.subr.mxu0 0.0
        %1531 = vmatpush1.msra.mxu0 0.0
        %1532 = vmatprep.subr.mxu0 0.0
        %1533 = vmatpush1.msra.mxu0 0.0
        %1534 = vmatprep.subr.mxu0 0.0
        %1535 = vmatpush1.msra.mxu0 0.0
        %1536 = vmatprep.subr.mxu0 0.0
        %1537 = vmatpush1.msra.mxu0 0.0
        %1538 = vmatprep.subr.mxu0 0.0
        %1539 = vmatpush1.msra.mxu0 0.0
        %1540 = vmatprep.subr.mxu0 0.0
        %1541 = vmatpush1.msra.mxu0 0.0
        %1542 = vmatprep.subr.mxu0 0.0
        %1543 = vmatpush1.msra.mxu0 0.0
        %1544 = vmatprep.subr.mxu0 0.0
        %1545 = vmatpush1.msra.mxu0 0.0
        %1546 = vmatprep.mubr.f32.mxu0 0.0
        %1547 = vmatmul.mubr.f32.gmra.mrb[0].mxu0 %v1480
        %v1548 = vpop.f32.mrb[0].mxu0
        %v1549 = vadd.f32 0.0, %v1548
        %v1550 = vpop.f32.mrb[0].mxu0
        %1551 = vdwg.mxu0
        %v1553 = vsel %vm796, %v1320, 0
        %1555 = vmatprep.subr.mxu0 0.0
        %1556 = vmatpush1.msra.mxu0 %v1476
        %1557 = vmatprep.subr.mxu0 0.0
        %1558 = vmatpush1.msra.mxu0 0.0
        %1559 = vmatprep.subr.mxu0 0.0
        %1560 = vmatpush1.msra.mxu0 0.0
        %1561 = vmatprep.subr.mxu0 0.0
        %1562 = vmatpush1.msra.mxu0 0.0
        %1563 = vmatprep.subr.mxu0 0.0
        %1564 = vmatpush1.msra.mxu0 0.0
        %1565 = vmatprep.subr.mxu0 0.0
        %1566 = vmatpush1.msra.mxu0 0.0
        %1567 = vmatprep.subr.mxu0 0.0
        %1568 = vmatpush1.msra.mxu0 0.0
        %1569 = vmatprep.subr.mxu0 0.0
        %1570 = vmatpush1.msra.mxu0 0.0
        %1571 = vmatprep.subr.mxu0 0.0
        %1572 = vmatpush1.msra.mxu0 0.0
        %1573 = vmatprep.subr.mxu0 0.0
        %1574 = vmatpush1.msra.mxu0 0.0
        %1575 = vmatprep.subr.mxu0 0.0
        %1576 = vmatpush1.msra.mxu0 0.0
        %1577 = vmatprep.subr.mxu0 0.0
        %1578 = vmatpush1.msra.mxu0 0.0
        %1579 = vmatprep.subr.mxu0 0.0
        %1580 = vmatpush1.msra.mxu0 0.0
        %1581 = vmatprep.subr.mxu0 0.0
        %1582 = vmatpush1.msra.mxu0 0.0
        %1583 = vmatprep.subr.mxu0 0.0
        %1584 = vmatpush1.msra.mxu0 0.0
        %1585 = vmatprep.subr.mxu0 0.0
        %1586 = vmatpush1.msra.mxu0 0.0
        %1587 = vmatprep.subr.mxu0 0.0
        %1588 = vmatpush1.msra.mxu0 0.0
        %1589 = vmatprep.subr.mxu0 0.0
        %1590 = vmatpush1.msra.mxu0 0.0
        %1591 = vmatprep.subr.mxu0 0.0
        %1592 = vmatpush1.msra.mxu0 0.0
        %1593 = vmatprep.subr.mxu0 0.0
        %1594 = vmatpush1.msra.mxu0 0.0
        %1595 = vmatprep.subr.mxu0 0.0
        %1596 = vmatpush1.msra.mxu0 0.0
        %1597 = vmatprep.subr.mxu0 0.0
        %1598 = vmatpush1.msra.mxu0 0.0
        %1599 = vmatprep.subr.mxu0 0.0
        %1600 = vmatpush1.msra.mxu0 0.0
        %1601 = vmatprep.subr.mxu0 0.0
        %1602 = vmatpush1.msra.mxu0 0.0
        %1603 = vmatprep.subr.mxu0 0.0
        %1604 = vmatpush1.msra.mxu0 0.0
        %1605 = vmatprep.subr.mxu0 0.0
        %1606 = vmatpush1.msra.mxu0 0.0
        %1607 = vmatprep.subr.mxu0 0.0
        %1608 = vmatpush1.msra.mxu0 0.0
        %1609 = vmatprep.subr.mxu0 0.0
        %1610 = vmatpush1.msra.mxu0 0.0
        %1611 = vmatprep.subr.mxu0 0.0
        %1612 = vmatpush1.msra.mxu0 0.0
        %1613 = vmatprep.subr.mxu0 0.0
        %1614 = vmatpush1.msra.mxu0 0.0
        %1615 = vmatprep.subr.mxu0 0.0
        %1616 = vmatpush1.msra.mxu0 0.0
        %1617 = vmatprep.subr.mxu0 0.0
        %1618 = vmatpush1.msra.mxu0 0.0
        %1619 = vmatprep.mubr.f32.mxu0 0.0
        %1620 = vmatmul.mubr.f32.gmra.mrb[0].mxu0 %v1553
        %v1621 = vpop.f32.mrb[0].mxu0
        %v1622 = vadd.f32 0.0, %v1621
        %v1623 = vpop.f32.mrb[0].mxu0
        %1624 = vdwg.mxu0
        %v1626 = vsel %vm796, %v1396, 0
        %1628 = vmatprep.subr.mxu0 0.0
        %1629 = vmatpush1.msra.mxu0 %v1477
        %1630 = vmatprep.subr.mxu0 0.0
        %1631 = vmatpush1.msra.mxu0 0.0
        %1632 = vmatprep.subr.mxu0 0.0
        %1633 = vmatpush1.msra.mxu0 0.0
        %1634 = vmatprep.subr.mxu0 0.0
        %1635 = vmatpush1.msra.mxu0 0.0
        %1636 = vmatprep.subr.mxu0 0.0
        %1637 = vmatpush1.msra.mxu0 0.0
        %1638 = vmatprep.subr.mxu0 0.0
        %1639 = vmatpush1.msra.mxu0 0.0
        %1640 = vmatprep.subr.mxu0 0.0
        %1641 = vmatpush1.msra.mxu0 0.0
        %1642 = vmatprep.subr.mxu0 0.0
        %1643 = vmatpush1.msra.mxu0 0.0
        %1644 = vmatprep.subr.mxu0 0.0
        %1645 = vmatpush1.msra.mxu0 0.0
        %1646 = vmatprep.subr.mxu0 0.0
        %1647 = vmatpush1.msra.mxu0 0.0
        %1648 = vmatprep.subr.mxu0 0.0
        %1649 = vmatpush1.msra.mxu0 0.0
        %1650 = vmatprep.subr.mxu0 0.0
        %1651 = vmatpush1.msra.mxu0 0.0
        %1652 = vmatprep.subr.mxu0 0.0
        %1653 = vmatpush1.msra.mxu0 0.0
        %1654 = vmatprep.subr.mxu0 0.0
        %1655 = vmatpush1.msra.mxu0 0.0
        %1656 = vmatprep.subr.mxu0 0.0
        %1657 = vmatpush1.msra.mxu0 0.0
        %1658 = vmatprep.subr.mxu0 0.0
        %1659 = vmatpush1.msra.mxu0 0.0
        %1660 = vmatprep.subr.mxu0 0.0
        %1661 = vmatpush1.msra.mxu0 0.0
        %1662 = vmatprep.subr.mxu0 0.0
        %1663 = vmatpush1.msra.mxu0 0.0
        %1664 = vmatprep.subr.mxu0 0.0
        %1665 = vmatpush1.msra.mxu0 0.0
        %1666 = vmatprep.subr.mxu0 0.0
        %1667 = vmatpush1.msra.mxu0 0.0
        %1668 = vmatprep.subr.mxu0 0.0
        %1669 = vmatpush1.msra.mxu0 0.0
        %1670 = vmatprep.subr.mxu0 0.0
        %1671 = vmatpush1.msra.mxu0 0.0
        %1672 = vmatprep.subr.mxu0 0.0
        %1673 = vmatpush1.msra.mxu0 0.0
        %1674 = vmatprep.subr.mxu0 0.0
        %1675 = vmatpush1.msra.mxu0 0.0
        %1676 = vmatprep.subr.mxu0 0.0
        %1677 = vmatpush1.msra.mxu0 0.0
        %1678 = vmatprep.subr.mxu0 0.0
        %1679 = vmatpush1.msra.mxu0 0.0
        %1680 = vmatprep.subr.mxu0 0.0
        %1681 = vmatpush1.msra.mxu0 0.0
        %1682 = vmatprep.subr.mxu0 0.0
        %1683 = vmatpush1.msra.mxu0 0.0
        %1684 = vmatprep.subr.mxu0 0.0
        %1685 = vmatpush1.msra.mxu0 0.0
        %1686 = vmatprep.subr.mxu0 0.0
        %1687 = vmatpush1.msra.mxu0 0.0
        %1688 = vmatprep.subr.mxu0 0.0
        %1689 = vmatpush1.msra.mxu0 0.0
        %1690 = vmatprep.subr.mxu0 0.0
        %1691 = vmatpush1.msra.mxu0 0.0
        %1692 = vmatprep.mubr.f32.mxu0 0.0
        %1693 = vmatmul.mubr.f32.gmra.mrb[0].mxu0 %v1626
        %v1694 = vpop.f32.mrb[0].mxu0
        %v1695 = vadd.f32 0.0, %v1694
        %v1696 = vpop.f32.mrb[0].mxu0
        %1697 = vdwg.mxu0
        %v1699 = vsel %vm796, %v1472, 0
        %1701 = vmatprep.subr.mxu0 0.0
        %1702 = vmatpush1.msra.mxu0 %v1478
        %1703 = vmatprep.subr.mxu0 0.0
        %1704 = vmatpush1.msra.mxu0 0.0
        %1705 = vmatprep.subr.mxu0 0.0
        %1706 = vmatpush1.msra.mxu0 0.0
        %1707 = vmatprep.subr.mxu0 0.0
        %1708 = vmatpush1.msra.mxu0 0.0
        %1709 = vmatprep.subr.mxu0 0.0
        %1710 = vmatpush1.msra.mxu0 0.0
        %1711 = vmatprep.subr.mxu0 0.0
        %1712 = vmatpush1.msra.mxu0 0.0
        %1713 = vmatprep.subr.mxu0 0.0
        %1714 = vmatpush1.msra.mxu0 0.0
        %1715 = vmatprep.subr.mxu0 0.0
        %1716 = vmatpush1.msra.mxu0 0.0
        %1717 = vmatprep.subr.mxu0 0.0
        %1718 = vmatpush1.msra.mxu0 0.0
        %1719 = vmatprep.subr.mxu0 0.0
        %1720 = vmatpush1.msra.mxu0 0.0
        %1721 = vmatprep.subr.mxu0 0.0
        %1722 = vmatpush1.msra.mxu0 0.0
        %1723 = vmatprep.subr.mxu0 0.0
        %1724 = vmatpush1.msra.mxu0 0.0
        %1725 = vmatprep.subr.mxu0 0.0
        %1726 = vmatpush1.msra.mxu0 0.0
        %1727 = vmatprep.subr.mxu0 0.0
        %1728 = vmatpush1.msra.mxu0 0.0
        %1729 = vmatprep.subr.mxu0 0.0
        %1730 = vmatpush1.msra.mxu0 0.0
        %1731 = vmatprep.subr.mxu0 0.0
        %1732 = vmatpush1.msra.mxu0 0.0
        %1733 = vmatprep.subr.mxu0 0.0
        %1734 = vmatpush1.msra.mxu0 0.0
        %1735 = vmatprep.subr.mxu0 0.0
        %1736 = vmatpush1.msra.mxu0 0.0
        %1737 = vmatprep.subr.mxu0 0.0
        %1738 = vmatpush1.msra.mxu0 0.0
        %1739 = vmatprep.subr.mxu0 0.0
        %1740 = vmatpush1.msra.mxu0 0.0
        %1741 = vmatprep.subr.mxu0 0.0
        %1742 = vmatpush1.msra.mxu0 0.0
        %1743 = vmatprep.subr.mxu0 0.0
        %1744 = vmatpush1.msra.mxu0 0.0
        %1745 = vmatprep.subr.mxu0 0.0
        %1746 = vmatpush1.msra.mxu0 0.0
        %1747 = vmatprep.subr.mxu0 0.0
        %1748 = vmatpush1.msra.mxu0 0.0
        %1749 = vmatprep.subr.mxu0 0.0
        %1750 = vmatpush1.msra.mxu0 0.0
        %1751 = vmatprep.subr.mxu0 0.0
        %1752 = vmatpush1.msra.mxu0 0.0
        %1753 = vmatprep.subr.mxu0 0.0
        %1754 = vmatpush1.msra.mxu0 0.0
        %1755 = vmatprep.subr.mxu0 0.0
        %1756 = vmatpush1.msra.mxu0 0.0
        %1757 = vmatprep.subr.mxu0 0.0
        %1758 = vmatpush1.msra.mxu0 0.0
        %1759 = vmatprep.subr.mxu0 0.0
        %1760 = vmatpush1.msra.mxu0 0.0
        %1761 = vmatprep.subr.mxu0 0.0
        %1762 = vmatpush1.msra.mxu0 0.0
        %1763 = vmatprep.subr.mxu0 0.0
        %1764 = vmatpush1.msra.mxu0 0.0
        %1765 = vmatprep.mubr.f32.mxu0 0.0
        %1766 = vmatmul.mubr.f32.gmra.mrb[0].mxu0 %v1699
        %v1767 = vpop.f32.mrb[0].mxu0
        %v1768 = vadd.f32 0.0, %v1767
        %v1769 = vpop.f32.mrb[0].mxu0
        %1770 = vdwg.mxu0
        %v1771 = vsel %vm509, %v1549, 0.0
        %v1772 = vsel %vm509, %v1622, 0.0
        %v1773 = vadd.f32 %v1771, %v1772
        %v1774 = vsel %vm509, %v1695, 0.0
        %v1775 = vadd.f32 %v1773, %v1774
        %v1776 = vsel %vm509, %v1768, 0.0
        %v1777 = vadd.f32 %v1775, %v1776
        %v1778 = vld [vmem:[%s5] sm:$0x1]
        %v1780 = vlaneseq
        %v1781 = vshrl.u32 %v1780, 7
        %v1782 = vsub.s32 0, %v1781
        %v1783 = vrot.slane %v1778, %v1782
        %v1785 = vadd.f32 %v1777, %v1783
        %v1786 = vadd.f32 %v1785, %v464
        %v1787 = vsel %vm509, %v1786, 0.0
        %1788 = vadd.xlane.f32.xlu0 %v1787
        %v1789 = vpop.xlane.xlu0 %1788
        %v1790 = vrcp.pop 32.0
        %v1791 = vmul.f32 %v1789, %v1790
        %v1792 = vsub.f32 %v1786, %v1791
        %v1793 = vmul.f32 %v1792, %v1792
        %v1794 = vsel %vm509, %v1793, 0.0
        %1795 = vadd.xlane.f32.xlu0 %v1794
        %v1796 = vpop.xlane.xlu0 %1795
        %v1797 = vmul.f32 %v1796, %v1790
        %v1798 = vadd.f32 %v1797, 1e-05
        %v1799 = vrsqrt.pop %v1798
        %v1800 = vmul.f32 %v1792, %v1799
        %v1801 = vld [vmem:[%s6] sm:$0x1]
        %v1803 = vlaneseq
        %v1804 = vshrl.u32 %v1803, 7
        %v1805 = vsub.s32 0, %v1804
        %v1806 = vrot.slane %v1801, %v1805
        %v1808 = vmul.f32 %v1800, %v1806
        %v1809 = vld [vmem:[%s7] sm:$0x1]
        %v1811 = vlaneseq
        %v1812 = vshrl.u32 %v1811, 7
        %v1813 = vsub.s32 0, %v1812
        %v1814 = vrot.slane %v1809, %v1813
        %v1816 = vadd.f32 %v1808, %v1814
        %v1817 = vld [vmem:[%s8] sm:$0xff]
        %v1818 = vld [vmem:[%s8 + $0x8] sm:$0xff]
        %v1819 = vld [vmem:[%s8 + $0x10] sm:$0xff]
        %v1820 = vld [vmem:[%s8 + $0x18] sm:$0xff]
        %v1821 = vld [vmem:[%s9] sm:$0x1]
        %v1823 = vlaneseq
        %v1824 = vshrl.u32 %v1823, 7
        %v1825 = vsub.s32 0, %v1824
        %v1826 = vrot.slane %v1821, %v1825
        %v1829 = vsel %vm509, %v1816, 0
        %1831 = vmatprep.subr.mxu0 0.0
        %1832 = vmatpush1.msra.mxu0 %v1817
        %1833 = vmatprep.subr.mxu0 0.0
        %1834 = vmatpush1.msra.mxu0 %v1818
        %1835 = vmatprep.subr.mxu0 0.0
        %1836 = vmatpush1.msra.mxu0 %v1819
        %1837 = vmatprep.subr.mxu0 0.0
        %1838 = vmatpush1.msra.mxu0 %v1820
        %1839 = vmatprep.subr.mxu0 0.0
        %1840 = vmatpush1.msra.mxu0 0.0
        %1841 = vmatprep.subr.mxu0 0.0
        %1842 = vmatpush1.msra.mxu0 0.0
        %1843 = vmatprep.subr.mxu0 0.0
        %1844 = vmatpush1.msra.mxu0 0.0
        %1845 = vmatprep.subr.mxu0 0.0
        %1846 = vmatpush1.msra.mxu0 0.0
        %1847 = vmatprep.subr.mxu0 0.0
        %1848 = vmatpush1.msra.mxu0 0.0
        %1849 = vmatprep.subr.mxu0 0.0
        %1850 = vmatpush1.msra.mxu0 0.0
        %1851 = vmatprep.subr.mxu0 0.0
        %1852 = vmatpush1.msra.mxu0 0.0
        %1853 = vmatprep.subr.mxu0 0.0
        %1854 = vmatpush1.msra.mxu0 0.0
        %1855 = vmatprep.subr.mxu0 0.0
        %1856 = vmatpush1.msra.mxu0 0.0
        %1857 = vmatprep.subr.mxu0 0.0
        %1858 = vmatpush1.msra.mxu0 0.0
        %1859 = vmatprep.subr.mxu0 0.0
        %1860 = vmatpush1.msra.mxu0 0.0
        %1861 = vmatprep.subr.mxu0 0.0
        %1862 = vmatpush1.msra.mxu0 0.0
        %1863 = vmatprep.subr.mxu0 0.0
        %1864 = vmatpush1.msra.mxu0 0.0
        %1865 = vmatprep.subr.mxu0 0.0
        %1866 = vmatpush1.msra.mxu0 0.0
        %1867 = vmatprep.subr.mxu0 0.0
        %1868 = vmatpush1.msra.mxu0 0.0
        %1869 = vmatprep.subr.mxu0 0.0
        %1870 = vmatpush1.msra.mxu0 0.0
        %1871 = vmatprep.subr.mxu0 0.0
        %1872 = vmatpush1.msra.mxu0 0.0
        %1873 = vmatprep.subr.mxu0 0.0
        %1874 = vmatpush1.msra.mxu0 0.0
        %1875 = vmatprep.subr.mxu0 0.0
        %1876 = vmatpush1.msra.mxu0 0.0
        %1877 = vmatprep.subr.mxu0 0.0
        %1878 = vmatpush1.msra.mxu0 0.0
        %1879 = vmatprep.subr.mxu0 0.0
        %1880 = vmatpush1.msra.mxu0 0.0
        %1881 = vmatprep.subr.mxu0 0.0
        %1882 = vmatpush1.msra.mxu0 0.0
        %1883 = vmatprep.subr.mxu0 0.0
        %1884 = vmatpush1.msra.mxu0 0.0
        %1885 = vmatprep.subr.mxu0 0.0
        %1886 = vmatpush1.msra.mxu0 0.0
        %1887 = vmatprep.subr.mxu0 0.0
        %1888 = vmatpush1.msra.mxu0 0.0
        %1889 = vmatprep.subr.mxu0 0.0
        %1890 = vmatpush1.msra.mxu0 0.0
        %1891 = vmatprep.subr.mxu0 0.0
        %1892 = vmatpush1.msra.mxu0 0.0
        %1893 = vmatprep.subr.mxu0 0.0
        %1894 = vmatpush1.msra.mxu0 0.0
        %1895 = vmatprep.mubr.f32.mxu0 0.0
        %1896 = vmatmul.mubr.f32.gmra.mrb[0].mxu0 %v1829
        %v1897 = vpop.f32.mrb[0].mxu0
        %v1898 = vadd.f32 %v1826, %v1897
        %v1899 = vpop.f32.mrb[0].mxu0
        %1900 = vdwg.mxu0
        %v1901 = vmul.f32 %v1898, 0.5
        %v1902 = vmul.f32 %v1898, 0.70710677
        %v1903 = verf.f32.pop %v1902
        %v1904 = vadd.f32 %v1903, 1.0
        %v1905 = vmul.f32 %v1901, %v1904
        %v1906 = vld [vmem:[%s10] sm:$0xff]
        %v1907 = vld [vmem:[%s10 + $0x8] sm:$0xff]
        %v1908 = vld [vmem:[%s10 + $0x10] sm:$0xff]
        %v1909 = vld [vmem:[%s10 + $0x18] sm:$0xff]
        %v1910 = vld [vmem:[%s10 + $0x20] sm:$0xff]
        %v1911 = vld [vmem:[%s10 + $0x28] sm:$0xff]
        %v1912 = vld [vmem:[%s10 + $0x30] sm:$0xff]
        %v1913 = vld [vmem:[%s10 + $0x38] sm:$0xff]
        %v1914 = vld [vmem:[%s11] sm:$0x1]
        %v1916 = vlaneseq
        %v1917 = vshrl.u32 %v1916, 7
        %v1918 = vsub.s32 0, %v1917
        %v1919 = vrot.slane %v1914, %v1918
        %vm1921 = vcmask 523264
        %v1923 = vsel %vm1921, %v1905, 0
        %1925 = vmatprep.subr.mxu0 0.0
        %1926 = vmatpush1.msra.mxu0 %v1906
        %1927 = vmatprep.subr.mxu0 0.0
        %1928 = vmatpush1.msra.mxu0 %v1907
        %1929 = vmatprep.subr.mxu0 0.0
        %1930 = vmatpush1.msra.mxu0 %v1908
        %1931 = vmatprep.subr.mxu0 0.0
        %1932 = vmatpush1.msra.mxu0 %v1909
        %1933 = vmatprep.subr.mxu0 0.0
        %1934 = vmatpush1.msra.mxu0 %v1910
        %1935 = vmatprep.subr.mxu0 0.0
        %1936 = vmatpush1.msra.mxu0 %v1911
        %1937 = vmatprep.subr.mxu0 0.0
        %1938 = vmatpush1.msra.mxu0 %v1912
        %1939 = vmatprep.subr.mxu0 0.0
        %1940 = vmatpush1.msra.mxu0 %v1913
        %1941 = vmatprep.subr.mxu0 0.0
        %1942 = vmatpush1.msra.mxu0 0.0
        %1943 = vmatprep.subr.mxu0 0.0
        %1944 = vmatpush1.msra.mxu0 0.0
        %1945 = vmatprep.subr.mxu0 0.0
        %1946 = vmatpush1.msra.mxu0 0.0
        %1947 = vmatprep.subr.mxu0 0.0
        %1948 = vmatpush1.msra.mxu0 0.0
        %1949 = vmatprep.subr.mxu0 0.0
        %1950 = vmatpush1.msra.mxu0 0.0
        %1951 = vmatprep.subr.mxu0 0.0
        %1952 = vmatpush1.msra.mxu0 0.0
        %1953 = vmatprep.subr.mxu0 0.0
        %1954 = vmatpush1.msra.mxu0 0.0
        %1955 = vmatprep.subr.mxu0 0.0
        %1956 = vmatpush1.msra.mxu0 0.0
        %1957 = vmatprep.subr.mxu0 0.0
        %1958 = vmatpush1.msra.mxu0 0.0
        %1959 = vmatprep.subr.mxu0 0.0
        %1960 = vmatpush1.msra.mxu0 0.0
        %1961 = vmatprep.subr.mxu0 0.0
        %1962 = vmatpush1.msra.mxu0 0.0
        %1963 = vmatprep.subr.mxu0 0.0
        %1964 = vmatpush1.msra.mxu0 0.0
        %1965 = vmatprep.subr.mxu0 0.0
        %1966 = vmatpush1.msra.mxu0 0.0
        %1967 = vmatprep.subr.mxu0 0.0
        %1968 = vmatpush1.msra.mxu0 0.0
        %1969 = vmatprep.subr.mxu0 0.0
        %1970 = vmatpush1.msra.mxu0 0.0
        %1971 = vmatprep.subr.mxu0 0.0
        %1972 = vmatpush1.msra.mxu0 0.0
        %1973 = vmatprep.subr.mxu0 0.0
        %1974 = vmatpush1.msra.mxu0 0.0
        %1975 = vmatprep.subr.mxu0 0.0
        %1976 = vmatpush1.msra.mxu0 0.0
        %1977 = vmatprep.subr.mxu0 0.0
        %1978 = vmatpush1.msra.mxu0 0.0
        %1979 = vmatprep.subr.mxu0 0.0
        %1980 = vmatpush1.msra.mxu0 0.0
        %1981 = vmatprep.subr.mxu0 0.0
        %1982 = vmatpush1.msra.mxu0 0.0
        %1983 = vmatprep.subr.mxu0 0.0
        %1984 = vmatpush1.msra.mxu0 0.0
        %1985 = vmatprep.subr.mxu0 0.0
        %1986 = vmatpush1.msra.mxu0 0.0
        %1987 = vmatprep.subr.mxu0 0.0
        %1988 = vmatpush1.msra.mxu0 0.0
        %1989 = vmatprep.mubr.f32.mxu0 0.0
        %1990 = vmatmul.mubr.f32.gmra.mrb[0].mxu0 %v1923
        %v1991 = vpop.f32.mrb[0].mxu0
        %v1992 = vadd.f32 %v1919, %v1991
        %v1993 = vpop.f32.mrb[0].mxu0
        %1994 = vdwg.mxu0
        %1995 = vst.msk [vmem:[%s448] sm:$0xff] %vm509, %v1992
        %s1996 = sand.u32 %s301, 1
        %s1997 = scalar_lea.sflag [#allocation3], %s1996
        %s1998 = sand.u32 %s301, 1
        %s1999 = smul.addr %s1998, 8
        %s2000 = scalar_lea.vmem [#allocation2], %s1999
        %s2001 = sand.u32 %s327, 1
        %s2002 = scalar_lea.sflag [#allocation5], %s2001
        %s2003 = sand.u32 %s327, 1
        %s2004 = smul.addr %s2003, 32
        %s2005 = scalar_lea.vmem [#allocation4], %s2004
        // Predicated region
        $region69: #{tpu_custom_call.1} parent=67 // pred_check
          %p2006 = pneg %p311
        $region70: #{tpu_custom_call.1} parent=67 // pred_check_branch
          %2008 = sbr.rel (%p2006) target = $region72
        $region71: #{tpu_custom_call.1} parent=67 // pred_region
          %s2010 = ssub.s32 128, 128
          %2011 = vsyncadd %s1997, %s2010
          %s2012 = smul.addr %s31, 128
          %s2013 = scalar_lea.hbm %s12, %s2012
          %s2015 = sshll.u32 %s2000, 4
          %s2016 = int_to_ptr.vmem [resolvable:$true] %s2015
          %2018 = dma.vmem_to_hbm [thread:$0]  %s2016, 128, %s2013, %s1997
        $region72: #{tpu_custom_call.1} parent=67 // pred_fallthru
          _
        // Predicated region
        $region73: #{tpu_custom_call.1} parent=67 // pred_check
          %p2019 = pneg %p337
        $region74: #{tpu_custom_call.1} parent=67 // pred_check_branch
          %2021 = sbr.rel (%p2019) target = $region76
        $region75: #{tpu_custom_call.1} parent=67 // pred_region
          %s2023 = ssub.s32 512, 512
          %2024 = vsyncadd %s2002, %s2023
          %s2025 = smul.addr %s31, 4
          %s2026 = smul.addr %s2025, 128
          %s2027 = scalar_lea.hbm %s13, %s2026
          %s2028 = sshll.u32 %s2005, 4
          %s2029 = int_to_ptr.vmem [resolvable:$true] %s2028
          %2034 = dma.vmem_to_hbm [thread:$0]  %s2029, 512, %s2027, %s2002, 128, 128, 8
        $region76: #{tpu_custom_call.1} parent=67 // pred_fallthru
          _
      $region68: #{tpu_custom_call.1} parent=5 // pred_fallthru
        _
      %p2035 = scmp.le.s32.totalorder 2, %s26
      // Predicated region
      $region77: #{tpu_custom_call.1} parent=5 // pred_check
        %p2036 = pneg %p2035
      $region78: #{tpu_custom_call.1} parent=5 // pred_check_branch
        %2038 = sbr.rel (%p2036) target = $region80
      $region79: #{tpu_custom_call.1} parent=5 // pred_region
        %s2039 = ssub.s32 %s26, 2
        // Predicated region
        $region81: #{tpu_custom_call.1} parent=79 // pred_check
          %p2040 = pneg %p317
        $region82: #{tpu_custom_call.1} parent=79 // pred_check_branch
          %2042 = sbr.rel (%p2040) target = $region84
        $region83: #{tpu_custom_call.1} parent=79 // pred_region
          %s2043 = sand.u32 %s302, 1
          %s2044 = scalar_lea.sflag [#allocation3], %s2043
          %s2045 = sand.u32 %s302, 1
          %s2046 = smul.addr %s2045, 8
          %s2047 = scalar_lea.vmem [#allocation2], %s2046
          %2048 = dma.done %s2044, 128
        $region84: #{tpu_custom_call.1} parent=79 // pred_fallthru
          _
        // Predicated region
        $region85: #{tpu_custom_call.1} parent=79 // pred_check
          %p2049 = pneg %p343
        $region86: #{tpu_custom_call.1} parent=79 // pred_check_branch
          %2051 = sbr.rel (%p2049) target = $region88
        $region87: #{tpu_custom_call.1} parent=79 // pred_region
          %s2052 = sand.u32 %s328, 1
          %s2053 = scalar_lea.sflag [#allocation5], %s2052
          %s2054 = sand.u32 %s328, 1
          %s2055 = smul.addr %s2054, 32
          %s2056 = scalar_lea.vmem [#allocation4], %s2055
          %2057 = dma.done %s2053, 512
        $region88: #{tpu_custom_call.1} parent=79 // pred_fallthru
          _
      $region80: #{tpu_custom_call.1} parent=5 // pred_fallthru
        _
    $region6: #{tpu_custom_call.1} parent=1 // loop_footer
      %s30 = sadd.s32 1, %s26
    $region7: #{tpu_custom_call.1} parent=1 // loop_footer_branch
      %25 = sbr.rel target = $region3
    $region8: #{tpu_custom_call.1} parent=1 // loop_exit
      _
    %2058 = vsyncpa [#allocation3], 1
    %s2059 = scalar_lea.sflag [#allocation3], 1
    %2060 = vsyncpa %s2059, 1
    %2061 = vsyncpa [#allocation5], 1
    %s2062 = scalar_lea.sflag [#allocation5], 1
    %2063 = vsyncpa %s2062, 1

</llo_original>
